<compile_context>
chip_gen: v7x
topology: tpu7x:2x2x1
jax: 0.10.0
libtpu: 0.0.40
codegen_flags: <defaults>
</compile_context>

<pallas_src>
import functools
import math

import numpy as np
import jax
import jax.numpy as jnp
from jax.experimental import pallas as pl
from jax.experimental.pallas import tpu as pltpu


# 3x3 tap offsets (row, col).  Tap-major order shared by the kernel (im2col
# row order) and the wrapper (weight-matrix column order).
_OFFSETS = tuple((oy, ox) for oy in (-1, 0, 1) for ox in (-1, 0, 1))


def _double_conv_kernel(x_ref, widx_ref, w1_ref, sc1_ref, sh1_ref,
                        w2_ref, sc2_ref, sh2_ref, o_ref, h1_ref,
                        *, cin, cmid, cout, height, width, batch_tile,
                        precision):
    s_total = height * width
    compute_dtype = h1_ref.dtype

    # ---- Border-validity masks, rebuilt in-kernel (8 non-center taps). ----
    # Row validity needs only the flattened lane index; column validity needs
    # the per-lane column index (a tiny int32 input, S*4 bytes).
    s_iota = jax.lax.broadcasted_iota(jnp.int32, (1, s_total), 1)
    w_idx = widx_ref[...]                                  # (1, S) int32
    row_ok = {-1: s_iota >= width, 0: None, 1: s_iota < (s_total - width)}
    col_ok = {-1: w_idx >= 1, 0: None, 1: w_idx < (width - 1)}
    masks = {}
    for oy, ox in _OFFSETS:
        if oy == 0 and ox == 0:
            continue
        ok = None
        for part in (row_ok[oy], col_ok[ox]):
            if part is not None:
                ok = part if ok is None else (ok & part)
        masks[(oy, ox)] = ok.astype(compute_dtype)         # (1, S) {0, 1}

    def im2col(src, nchan):
        """Stack the 9 shifted/masked taps of `src` ((nchan, S)) -> (9*nchan, S)."""
        taps = []
        for oy, ox in _OFFSETS:
            d = oy * width + ox                            # flat tap offset
            xs = src if d == 0 else pltpu.roll(src, shift=(-d) % s_total, axis=1)
            if (oy, ox) != (0, 0):
                xs = xs * masks[(oy, ox)]                  # zero out-of-image taps
            taps.append(xs)
        return jnp.concatenate(taps, axis=0)

    w1 = w1_ref[...]                                       # (Cmid, 9*Cin)  VMEM
    w2 = w2_ref[...]                                       # (Cout, 9*Cmid) VMEM
    sc1, sh1 = sc1_ref[...], sh1_ref[...]                  # (Cmid, 1) f32
    sc2, sh2 = sc2_ref[...], sh2_ref[...]                  # (Cout, 1) f32

    for b in range(batch_tile):
        x = x_ref[b].astype(compute_dtype)                 # (Cin, S), lane-dense

        # ---- layer 1: conv3x3 (MXU) + BN(eval) + ReLU ----
        a1 = im2col(x, cin)                                # (9*Cin, S)
        conv1 = jnp.dot(w1, a1, preferred_element_type=jnp.float32,
                        precision=precision)               # (Cmid, S) f32
        h1 = jnp.maximum(conv1 * sc1 + sh1, 0.0)
        h1_ref[...] = h1.astype(compute_dtype)             # stays in VMEM scratch

        # ---- layer 2: conv3x3 (MXU) + BN(eval) + ReLU ----
        a2 = im2col(h1_ref[...], cmid)                     # (9*Cmid, S)
        conv2 = jnp.dot(w2, a2, preferred_element_type=jnp.float32,
                        precision=precision)               # (Cout, S) f32
        y = jnp.maximum(conv2 * sc2 + sh2, 0.0)
        o_ref[b] = y.astype(o_ref.dtype)                   # lane-dense store


def double_conv_pallas(x, params, *, eps=1e-5, batch_tile=1,
                       compute_dtype=jnp.float32):
    """DoubleConv forward (inference-mode BatchNorm).

    Args:
      x: (N, Cin, H, W) float32, PyTorch NCHW layout.
      params: dict of PyTorch-layout parameters (see init_double_conv_params).
      batch_tile: images processed per grid step (amortizes per-step overhead).
      compute_dtype: MXU operand dtype; use jnp.bfloat16 on v6e/v7x for the
        high-rate MXU path (f32 accumulation is kept either way).
    Returns:
      (N, Cout, H, W) in x.dtype.
    """
    n, cin, height, width = x.shape
    w1, w2 = params["w1"], params["w2"]
    cmid, cout = w1.shape[0], w2.shape[0]
    s_total = height * width
    if n % batch_tile != 0:
        batch_tile = math.gcd(n, batch_tile) or 1

    # Fold conv bias + BatchNorm(eval) into one per-channel scale/shift.
    scale1 = params["bn1_gamma"] * jax.lax.rsqrt(params["bn1_var"] + eps)
    shift1 = (params["b1"] - params["bn1_mean"]) * scale1 + params["bn1_beta"]
    scale2 = params["bn2_gamma"] * jax.lax.rsqrt(params["bn2_var"] + eps)
    shift2 = (params["b2"] - params["bn2_mean"]) * scale2 + params["bn2_beta"]

    # NCHW consumed directly: a contiguous reshape puts S = H*W on lanes and
    # channels on sublanes.  No wrapper transposes of the activations.
    x_flat = x.reshape(n, cin, s_total)
    w_idx = jnp.tile(jnp.arange(width, dtype=jnp.int32),
                     height).reshape(1, s_total)

    # im2col weight matrices: W'[co, t*Cin + ci] = w[co, ci, ky_t, kx_t].
    w1_mat = jnp.transpose(w1, (0, 2, 3, 1)).reshape(cmid, 9 * cin)
    w2_mat = jnp.transpose(w2, (0, 2, 3, 1)).reshape(cout, 9 * cmid)
    w1_mat = w1_mat.astype(compute_dtype)
    w2_mat = w2_mat.astype(compute_dtype)

    sc1 = scale1.reshape(cmid, 1).astype(jnp.float32)
    sh1 = shift1.reshape(cmid, 1).astype(jnp.float32)
    sc2 = scale2.reshape(cout, 1).astype(jnp.float32)
    sh2 = shift2.reshape(cout, 1).astype(jnp.float32)

    precision = (jax.lax.Precision.HIGHEST
                 if compute_dtype == jnp.float32
                 else jax.lax.Precision.DEFAULT)
    kernel = functools.partial(
        _double_conv_kernel, cin=cin, cmid=cmid, cout=cout, height=height,
        width=width, batch_tile=batch_tile, precision=precision)

    # Advisory cost estimate + explicit VMEM budget: 2x double-buffered I/O
    # blocks + weights + h1 scratch + im2col live-value headroom, capped below
    # v7x's 64 MiB physical VMEM per TensorCore.
    flops = 2 * n * s_total * 9 * (cin * cmid + cmid * cout)
    itm = np.dtype(compute_dtype).itemsize
    xitm = x.dtype.itemsize
    bytes_accessed = int((x_flat.size + n * cout * s_total) * xitm
                         + (w1_mat.size + w2_mat.size) * itm
                         + s_total * 4)
    vmem_needed = (
        2 * batch_tile * (cin + cout) * s_total * xitm        # in/out blocks
        + 2 * s_total * 4                                     # w_idx
        + 2 * (w1_mat.size + w2_mat.size + 2 * (cmid + cout) * 4)
        + cmid * s_total * itm                                # h1 scratch
        + 2 * 9 * max(cin, cmid) * s_total * itm)             # im2col headroom
    vmem_limit = int(min(max(2 * vmem_needed, 32 * 2 ** 20), 64 * 2 ** 20))

    grid = (n // batch_tile,)
    out_flat = pl.pallas_call(
        kernel,
        out_shape=jax.ShapeDtypeStruct((n, cout, s_total), x.dtype),
        grid_spec=pltpu.PrefetchScalarGridSpec(
            num_scalar_prefetch=0,
            grid=grid,
            in_specs=[
                pl.BlockSpec((batch_tile, cin, s_total), lambda i: (i, 0, 0)),
                pl.BlockSpec((1, s_total), lambda i: (0, 0)),       # w_idx
                pl.BlockSpec((cmid, 9 * cin), lambda i: (0, 0)),    # W1'
                pl.BlockSpec((cmid, 1), lambda i: (0, 0)),          # scale1
                pl.BlockSpec((cmid, 1), lambda i: (0, 0)),          # shift1
                pl.BlockSpec((cout, 9 * cmid), lambda i: (0, 0)),   # W2'
                pl.BlockSpec((cout, 1), lambda i: (0, 0)),          # scale2
                pl.BlockSpec((cout, 1), lambda i: (0, 0)),          # shift2
            ],
            out_specs=pl.BlockSpec((batch_tile, cout, s_total),
                                   lambda i: (i, 0, 0)),
            scratch_shapes=[pltpu.VMEM((cmid, s_total), compute_dtype)],
        ),
        compiler_params=pltpu.CompilerParams(
            dimension_semantics=("parallel",),
            vmem_limit_bytes=vmem_limit),
        cost_estimate=pl.CostEstimate(
            flops=flops, transcendentals=0, bytes_accessed=bytes_accessed),
    )(x_flat, w_idx, w1_mat, sc1, sh1, w2_mat, sc2, sh2)

    return out_flat.reshape(n, cout, height, width)


def init_double_conv_params(key, in_channels, out_channels):
    """Deterministic init mirroring nn.Conv2d defaults; BN uses non-trivial
    (but fixed) inference statistics so the BN path is actually exercised."""
    k = jax.random.split(key, 12)

    def conv_init(kw, kb, cin, cout):
        bound = 1.0 / math.sqrt(cin * 3 * 3)
        w = jax.random.uniform(kw, (cout, cin, 3, 3), dtype=jnp.float32,
                               minval=-bound, maxval=bound)
        b = jax.random.uniform(kb, (cout,), dtype=jnp.float32,
                               minval=-bound, maxval=bound)
        return w, b

    def bn_init(kg, kb, km, kv, c):
        gamma = 1.0 + 0.1 * jax.random.normal(kg, (c,), dtype=jnp.float32)
        beta = 0.1 * jax.random.normal(kb, (c,), dtype=jnp.float32)
        mean = 0.1 * jax.random.normal(km, (c,), dtype=jnp.float32)
        var = jax.random.uniform(kv, (c,), dtype=jnp.float32,
                                 minval=0.5, maxval=1.5)
        return gamma, beta, mean, var

    w1, b1 = conv_init(k[0], k[1], in_channels, out_channels)
    g1, be1, m1, v1 = bn_init(k[2], k[3], k[4], k[5], out_channels)
    w2, b2 = conv_init(k[6], k[7], out_channels, out_channels)
    g2, be2, m2, v2 = bn_init(k[8], k[9], k[10], k[11], out_channels)
    return dict(w1=w1, b1=b1, bn1_gamma=g1, bn1_beta=be1, bn1_mean=m1,
                bn1_var=v1, w2=w2, b2=b2, bn2_gamma=g2, bn2_beta=be2,
                bn2_mean=m2, bn2_var=v2)


def double_conv_reference(x, params, *, eps=1e-5):
    """Plain-JAX reference with the same semantics (eval-mode BN)."""
    def layer(h, w, b, gamma, beta, mean, var):
        y = jax.lax.conv_general_dilated(
            h, w, window_strides=(1, 1), padding=((1, 1), (1, 1)),
            dimension_numbers=("NCHW", "OIHW", "NCHW"),
            precision=jax.lax.Precision.HIGHEST)
        y = y + b[None, :, None, None]
        y = (y - mean[None, :, None, None]) * jax.lax.rsqrt(
            var[None, :, None, None] + eps)
        y = y * gamma[None, :, None, None] + beta[None, :, None, None]
        return jnp.maximum(y, 0.0)

    h = layer(x, params["w1"], params["b1"], params["bn1_gamma"],
              params["bn1_beta"], params["bn1_mean"], params["bn1_var"])
    return layer(h, params["w2"], params["b2"], params["bn2_gamma"],
                 params["bn2_beta"], params["bn2_mean"], params["bn2_var"])


if __name__ == "__main__":
    key = jax.random.PRNGKey(0)
    k_x, k_p = jax.random.split(key)

    N, Cin, H, W = 2, 4, 16, 16
    Cout = 8

    x = jax.random.normal(k_x, (N, Cin, H, W), dtype=jnp.float32)
    params = init_double_conv_params(k_p, Cin, Cout)

    y = jax.jit(double_conv_pallas)(x, params)
    y = jax.block_until_ready(y)

    y_ref = double_conv_reference(x, params)
    assert y.shape == (N, Cout, H, W)
    max_err = float(jnp.max(jnp.abs(y - y_ref)))
    assert jnp.allclose(y, y_ref, atol=1e-3, rtol=1e-3), max_err

    print("KERNEL_OK")
</pallas_src>

<mosaic_0001>
module attributes {stable_mosaic.version = 11 : i64} {
  func.func @_double_conv_kernel(%arg0: i32, %arg1: memref<1x4x256xf32, #tpu.memory_space<vmem>>, %arg2: memref<1x256xi32, #tpu.memory_space<vmem>>, %arg3: memref<8x36xf32, #tpu.memory_space<vmem>>, %arg4: memref<8x1xf32, #tpu.memory_space<vmem>>, %arg5: memref<8x1xf32, #tpu.memory_space<vmem>>, %arg6: memref<8x72xf32, #tpu.memory_space<vmem>>, %arg7: memref<8x1xf32, #tpu.memory_space<vmem>>, %arg8: memref<8x1xf32, #tpu.memory_space<vmem>>, %arg9: memref<1x8x256xf32, #tpu.memory_space<vmem>>, %arg10: memref<8x256xf32, #tpu.memory_space<vmem>>) attributes {dimension_semantics = [#tpu.dimension_semantics<parallel>], iteration_bounds = array<i64: 2>, scalar_prefetch = 0 : i64, scratch_operands = 1 : i64, tpu.core_type = #tpu.core_type<tc>, window_params = [{transform_indices = @transform_0, window_bounds = array<i64: 1, 4, 256>}, {pipeline_mode = #tpu.pipeline_mode<synchronous>, transform_indices = @transform_1, window_bounds = array<i64: 1, 256>}, {pipeline_mode = #tpu.pipeline_mode<synchronous>, transform_indices = @transform_2, window_bounds = array<i64: 8, 36>}, {pipeline_mode = #tpu.pipeline_mode<synchronous>, transform_indices = @transform_3, window_bounds = array<i64: 8, 1>}, {pipeline_mode = #tpu.pipeline_mode<synchronous>, transform_indices = @transform_4, window_bounds = array<i64: 8, 1>}, {pipeline_mode = #tpu.pipeline_mode<synchronous>, transform_indices = @transform_5, window_bounds = array<i64: 8, 72>}, {pipeline_mode = #tpu.pipeline_mode<synchronous>, transform_indices = @transform_6, window_bounds = array<i64: 8, 1>}, {pipeline_mode = #tpu.pipeline_mode<synchronous>, transform_indices = @transform_7, window_bounds = array<i64: 8, 1>}, {transform_indices = @transform_8, window_bounds = array<i64: 1, 8, 256>}]} {
    %0 = tpu.iota {dimensions = array<i32: 1>} : vector<1x256xi32>
    %c0 = arith.constant 0 : index
    %c0_0 = arith.constant 0 : index
    %1 = vector.load %arg2[%c0, %c0_0] : memref<1x256xi32, #tpu.memory_space<vmem>>, vector<1x256xi32>
    %c16_i32 = arith.constant 16 : i32
    %2 = vector.broadcast %c16_i32 : i32 to vector<1x256xi32>
    %3 = arith.cmpi sge, %0, %2 : vector<1x256xi32>
    %c240_i32 = arith.constant 240 : i32
    %4 = vector.broadcast %c240_i32 : i32 to vector<1x256xi32>
    %5 = arith.cmpi slt, %0, %4 : vector<1x256xi32>
    %c1_i32 = arith.constant 1 : i32
    %6 = vector.broadcast %c1_i32 : i32 to vector<1x256xi32>
    %7 = arith.cmpi sge, %1, %6 : vector<1x256xi32>
    %c15_i32 = arith.constant 15 : i32
    %8 = vector.broadcast %c15_i32 : i32 to vector<1x256xi32>
    %9 = arith.cmpi slt, %1, %8 : vector<1x256xi32>
    %10 = arith.andi %3, %7 : vector<1x256xi1>
    %11 = arith.extui %10 : vector<1x256xi1> to vector<1x256xi32>
    %12 = arith.sitofp %11 : vector<1x256xi32> to vector<1x256xf32>
    %13 = arith.extui %3 : vector<1x256xi1> to vector<1x256xi32>
    %14 = arith.sitofp %13 : vector<1x256xi32> to vector<1x256xf32>
    %15 = arith.andi %3, %9 : vector<1x256xi1>
    %16 = arith.extui %15 : vector<1x256xi1> to vector<1x256xi32>
    %17 = arith.sitofp %16 : vector<1x256xi32> to vector<1x256xf32>
    %18 = arith.extui %7 : vector<1x256xi1> to vector<1x256xi32>
    %19 = arith.sitofp %18 : vector<1x256xi32> to vector<1x256xf32>
    %20 = arith.extui %9 : vector<1x256xi1> to vector<1x256xi32>
    %21 = arith.sitofp %20 : vector<1x256xi32> to vector<1x256xf32>
    %22 = arith.andi %5, %7 : vector<1x256xi1>
    %23 = arith.extui %22 : vector<1x256xi1> to vector<1x256xi32>
    %24 = arith.sitofp %23 : vector<1x256xi32> to vector<1x256xf32>
    %25 = arith.extui %5 : vector<1x256xi1> to vector<1x256xi32>
    %26 = arith.sitofp %25 : vector<1x256xi32> to vector<1x256xf32>
    %27 = arith.andi %5, %9 : vector<1x256xi1>
    %28 = arith.extui %27 : vector<1x256xi1> to vector<1x256xi32>
    %29 = arith.sitofp %28 : vector<1x256xi32> to vector<1x256xf32>
    %c0_1 = arith.constant 0 : index
    %c0_2 = arith.constant 0 : index
    %30 = vector.load %arg3[%c0_1, %c0_2] : memref<8x36xf32, #tpu.memory_space<vmem>>, vector<8x36xf32>
    %c0_3 = arith.constant 0 : index
    %c0_4 = arith.constant 0 : index
    %31 = vector.load %arg6[%c0_3, %c0_4] : memref<8x72xf32, #tpu.memory_space<vmem>>, vector<8x72xf32>
    %c0_5 = arith.constant 0 : index
    %c0_6 = arith.constant 0 : index
    %32 = vector.load %arg4[%c0_5, %c0_6] : memref<8x1xf32, #tpu.memory_space<vmem>>, vector<8x1xf32>
    %c0_7 = arith.constant 0 : index
    %c0_8 = arith.constant 0 : index
    %33 = vector.load %arg5[%c0_7, %c0_8] : memref<8x1xf32, #tpu.memory_space<vmem>>, vector<8x1xf32>
    %c0_9 = arith.constant 0 : index
    %c0_10 = arith.constant 0 : index
    %34 = vector.load %arg7[%c0_9, %c0_10] : memref<8x1xf32, #tpu.memory_space<vmem>>, vector<8x1xf32>
    %c0_11 = arith.constant 0 : index
    %c0_12 = arith.constant 0 : index
    %35 = vector.load %arg8[%c0_11, %c0_12] : memref<8x1xf32, #tpu.memory_space<vmem>>, vector<8x1xf32>
    %c0_13 = arith.constant 0 : index
    %c0_14 = arith.constant 0 : index
    %c0_15 = arith.constant 0 : index
    %36 = vector.load %arg1[%c0_13, %c0_14, %c0_15] : memref<1x4x256xf32, #tpu.memory_space<vmem>>, vector<1x4x256xf32>
    %37 = vector.shape_cast %36 : vector<1x4x256xf32> to vector<4x256xf32>
    %c17_i32 = arith.constant 17 : i32
    %38 = tpu.dynamic_rotate %37 by %c17_i32 dim 1 : vector<4x256xf32>, i32 -> vector<4x256xf32>
    %39 = vector.broadcast %12 : vector<1x256xf32> to vector<4x256xf32>
    %40 = arith.mulf %38, %39 : vector<4x256xf32>
    %c16_i32_16 = arith.constant 16 : i32
    %41 = tpu.dynamic_rotate %37 by %c16_i32_16 dim 1 : vector<4x256xf32>, i32 -> vector<4x256xf32>
    %42 = vector.broadcast %14 : vector<1x256xf32> to vector<4x256xf32>
    %43 = arith.mulf %41, %42 : vector<4x256xf32>
    %c15_i32_17 = arith.constant 15 : i32
    %44 = tpu.dynamic_rotate %37 by %c15_i32_17 dim 1 : vector<4x256xf32>, i32 -> vector<4x256xf32>
    %45 = vector.broadcast %17 : vector<1x256xf32> to vector<4x256xf32>
    %46 = arith.mulf %44, %45 : vector<4x256xf32>
    %c1_i32_18 = arith.constant 1 : i32
    %47 = tpu.dynamic_rotate %37 by %c1_i32_18 dim 1 : vector<4x256xf32>, i32 -> vector<4x256xf32>
    %48 = vector.broadcast %19 : vector<1x256xf32> to vector<4x256xf32>
    %49 = arith.mulf %47, %48 : vector<4x256xf32>
    %c255_i32 = arith.constant 255 : i32
    %50 = tpu.dynamic_rotate %37 by %c255_i32 dim 1 : vector<4x256xf32>, i32 -> vector<4x256xf32>
    %51 = vector.broadcast %21 : vector<1x256xf32> to vector<4x256xf32>
    %52 = arith.mulf %50, %51 : vector<4x256xf32>
    %c241_i32 = arith.constant 241 : i32
    %53 = tpu.dynamic_rotate %37 by %c241_i32 dim 1 : vector<4x256xf32>, i32 -> vector<4x256xf32>
    %54 = vector.broadcast %24 : vector<1x256xf32> to vector<4x256xf32>
    %55 = arith.mulf %53, %54 : vector<4x256xf32>
    %c240_i32_19 = arith.constant 240 : i32
    %56 = tpu.dynamic_rotate %37 by %c240_i32_19 dim 1 : vector<4x256xf32>, i32 -> vector<4x256xf32>
    %57 = vector.broadcast %26 : vector<1x256xf32> to vector<4x256xf32>
    %58 = arith.mulf %56, %57 : vector<4x256xf32>
    %c239_i32 = arith.constant 239 : i32
    %59 = tpu.dynamic_rotate %37 by %c239_i32 dim 1 : vector<4x256xf32>, i32 -> vector<4x256xf32>
    %60 = vector.broadcast %29 : vector<1x256xf32> to vector<4x256xf32>
    %61 = arith.mulf %59, %60 : vector<4x256xf32>
    %62 = tpu.concatenate %40, %43, %46, %49, %37, %52, %55, %58, %61 in 0 : vector<4x256xf32>, vector<4x256xf32>, vector<4x256xf32>, vector<4x256xf32>, vector<4x256xf32>, vector<4x256xf32>, vector<4x256xf32>, vector<4x256xf32>, vector<4x256xf32> -> vector<36x256xf32>
    %cst = arith.constant dense<0.000000e+00> : vector<8x256xf32>
    %63 = tpu.matmul %30, %62, %cst {dimension_numbers = #tpu.dot_dimension_numbers<[1], [0], [0], [1], [0, 0, 1, 1], [], []>, precision = #tpu.contract_precision<fp32>} : vector<8x36xf32>, vector<36x256xf32>, vector<8x256xf32> -> vector<8x256xf32>
    %64 = vector.broadcast %32 : vector<8x1xf32> to vector<8x256xf32>
    %65 = arith.mulf %63, %64 : vector<8x256xf32>
    %66 = vector.broadcast %33 : vector<8x1xf32> to vector<8x256xf32>
    %67 = arith.addf %65, %66 : vector<8x256xf32>
    %cst_20 = arith.constant 0.000000e+00 : f32
    %68 = vector.broadcast %cst_20 : f32 to vector<8x256xf32>
    %69 = arith.maximumf %67, %68 : vector<8x256xf32>
    %c0_21 = arith.constant 0 : index
    %c0_22 = arith.constant 0 : index
    %70 = vector.load %arg10[%c0_21, %c0_22] : memref<8x256xf32, #tpu.memory_space<vmem>>, vector<8x256xf32>
    tpu.vector_store %arg10[%c0_21, %c0_22], %69 {strides = array<i32>} : memref<8x256xf32, #tpu.memory_space<vmem>>, vector<8x256xf32>,
    %c0_23 = arith.constant 0 : index
    %c0_24 = arith.constant 0 : index
    %71 = vector.load %arg10[%c0_23, %c0_24] : memref<8x256xf32, #tpu.memory_space<vmem>>, vector<8x256xf32>
    %c17_i32_25 = arith.constant 17 : i32
    %72 = tpu.dynamic_rotate %71 by %c17_i32_25 dim 1 : vector<8x256xf32>, i32 -> vector<8x256xf32>
    %73 = vector.broadcast %12 : vector<1x256xf32> to vector<8x256xf32>
    %74 = arith.mulf %72, %73 : vector<8x256xf32>
    %c16_i32_26 = arith.constant 16 : i32
    %75 = tpu.dynamic_rotate %71 by %c16_i32_26 dim 1 : vector<8x256xf32>, i32 -> vector<8x256xf32>
    %76 = vector.broadcast %14 : vector<1x256xf32> to vector<8x256xf32>
    %77 = arith.mulf %75, %76 : vector<8x256xf32>
    %c15_i32_27 = arith.constant 15 : i32
    %78 = tpu.dynamic_rotate %71 by %c15_i32_27 dim 1 : vector<8x256xf32>, i32 -> vector<8x256xf32>
    %79 = vector.broadcast %17 : vector<1x256xf32> to vector<8x256xf32>
    %80 = arith.mulf %78, %79 : vector<8x256xf32>
    %c1_i32_28 = arith.constant 1 : i32
    %81 = tpu.dynamic_rotate %71 by %c1_i32_28 dim 1 : vector<8x256xf32>, i32 -> vector<8x256xf32>
    %82 = vector.broadcast %19 : vector<1x256xf32> to vector<8x256xf32>
    %83 = arith.mulf %81, %82 : vector<8x256xf32>
    %c255_i32_29 = arith.constant 255 : i32
    %84 = tpu.dynamic_rotate %71 by %c255_i32_29 dim 1 : vector<8x256xf32>, i32 -> vector<8x256xf32>
    %85 = vector.broadcast %21 : vector<1x256xf32> to vector<8x256xf32>
    %86 = arith.mulf %84, %85 : vector<8x256xf32>
    %c241_i32_30 = arith.constant 241 : i32
    %87 = tpu.dynamic_rotate %71 by %c241_i32_30 dim 1 : vector<8x256xf32>, i32 -> vector<8x256xf32>
    %88 = vector.broadcast %24 : vector<1x256xf32> to vector<8x256xf32>
    %89 = arith.mulf %87, %88 : vector<8x256xf32>
    %c240_i32_31 = arith.constant 240 : i32
    %90 = tpu.dynamic_rotate %71 by %c240_i32_31 dim 1 : vector<8x256xf32>, i32 -> vector<8x256xf32>
    %91 = vector.broadcast %26 : vector<1x256xf32> to vector<8x256xf32>
    %92 = arith.mulf %90, %91 : vector<8x256xf32>
    %c239_i32_32 = arith.constant 239 : i32
    %93 = tpu.dynamic_rotate %71 by %c239_i32_32 dim 1 : vector<8x256xf32>, i32 -> vector<8x256xf32>
    %94 = vector.broadcast %29 : vector<1x256xf32> to vector<8x256xf32>
    %95 = arith.mulf %93, %94 : vector<8x256xf32>
    %96 = tpu.concatenate %74, %77, %80, %83, %71, %86, %89, %92, %95 in 0 : vector<8x256xf32>, vector<8x256xf32>, vector<8x256xf32>, vector<8x256xf32>, vector<8x256xf32>, vector<8x256xf32>, vector<8x256xf32>, vector<8x256xf32>, vector<8x256xf32> -> vector<72x256xf32>
    %cst_33 = arith.constant dense<0.000000e+00> : vector<8x256xf32>
    %97 = tpu.matmul %31, %96, %cst_33 {dimension_numbers = #tpu.dot_dimension_numbers<[1], [0], [0], [1], [0, 0, 1, 1], [], []>, precision = #tpu.contract_precision<fp32>} : vector<8x72xf32>, vector<72x256xf32>, vector<8x256xf32> -> vector<8x256xf32>
    %98 = vector.broadcast %34 : vector<8x1xf32> to vector<8x256xf32>
    %99 = arith.mulf %97, %98 : vector<8x256xf32>
    %100 = vector.broadcast %35 : vector<8x1xf32> to vector<8x256xf32>
    %101 = arith.addf %99, %100 : vector<8x256xf32>
    %cst_34 = arith.constant 0.000000e+00 : f32
    %102 = vector.broadcast %cst_34 : f32 to vector<8x256xf32>
    %103 = arith.maximumf %101, %102 : vector<8x256xf32>
    %c0_35 = arith.constant 0 : index
    %c0_36 = arith.constant 0 : index
    %c0_37 = arith.constant 0 : index
    %104 = vector.load %arg9[%c0_35, %c0_36, %c0_37] : memref<1x8x256xf32, #tpu.memory_space<vmem>>, vector<1x8x256xf32>
    %105 = vector.shape_cast %104 : vector<1x8x256xf32> to vector<8x256xf32>
    %106 = vector.shape_cast %103 : vector<8x256xf32> to vector<1x8x256xf32>
    tpu.vector_store %arg9[%c0_35, %c0_36, %c0_37], %106 {strides = array<i32>} : memref<1x8x256xf32, #tpu.memory_space<vmem>>, vector<1x8x256xf32>,
    return
  }
  func.func @transform_0(%arg0: i32) -> (i32, i32, i32) {
    %c0_i32 = arith.constant 0 : i32
    %c0_i32_0 = arith.constant 0 : i32
    %c0_i32_1 = arith.constant 0 : i32
    return %arg0, %c0_i32, %c0_i32_0 : i32, i32, i32
  }
  func.func @transform_1(%arg0: i32) -> (i32, i32) {
    %c0_i32 = arith.constant 0 : i32
    %c0_i32_0 = arith.constant 0 : i32
    %c0_i32_1 = arith.constant 0 : i32
    return %c0_i32, %c0_i32_0 : i32, i32
  }
  func.func @transform_2(%arg0: i32) -> (i32, i32) {
    %c0_i32 = arith.constant 0 : i32
    %c0_i32_0 = arith.constant 0 : i32
    %c0_i32_1 = arith.constant 0 : i32
    return %c0_i32, %c0_i32_0 : i32, i32
  }
  func.func @transform_3(%arg0: i32) -> (i32, i32) {
    %c0_i32 = arith.constant 0 : i32
    %c0_i32_0 = arith.constant 0 : i32
    %c0_i32_1 = arith.constant 0 : i32
    return %c0_i32, %c0_i32_0 : i32, i32
  }
  func.func @transform_4(%arg0: i32) -> (i32, i32) {
    %c0_i32 = arith.constant 0 : i32
    %c0_i32_0 = arith.constant 0 : i32
    %c0_i32_1 = arith.constant 0 : i32
    return %c0_i32, %c0_i32_0 : i32, i32
  }
  func.func @transform_5(%arg0: i32) -> (i32, i32) {
    %c0_i32 = arith.constant 0 : i32
    %c0_i32_0 = arith.constant 0 : i32
    %c0_i32_1 = arith.constant 0 : i32
    return %c0_i32, %c0_i32_0 : i32, i32
  }
  func.func @transform_6(%arg0: i32) -> (i32, i32) {
    %c0_i32 = arith.constant 0 : i32
    %c0_i32_0 = arith.constant 0 : i32
    %c0_i32_1 = arith.constant 0 : i32
    return %c0_i32, %c0_i32_0 : i32, i32
  }
  func.func @transform_7(%arg0: i32) -> (i32, i32) {
    %c0_i32 = arith.constant 0 : i32
    %c0_i32_0 = arith.constant 0 : i32
    %c0_i32_1 = arith.constant 0 : i32
    return %c0_i32, %c0_i32_0 : i32, i32
  }
  func.func @transform_8(%arg0: i32) -> (i32, i32, i32) {
    %c0_i32 = arith.constant 0 : i32
    %c0_i32_0 = arith.constant 0 : i32
    %c0_i32_1 = arith.constant 0 : i32
    return %arg0, %c0_i32, %c0_i32_0 : i32, i32, i32
  }
}

</mosaic_0001>

<llo_original>
// kernel: tile.9
$region0: #{tile.9}
  %s0 = inlined_call_operand.vmem [shape: s32[16,16], index: 0, kind: input, shape index: {}]
  %s1 = inlined_call_operand.vmem [shape: s32[1,256], index: 1, kind: output, shape index: {}]
  $region1: #{tile.9} parent=0
    #allocation0 [shape = 'u8[8192]{0}', space=vmem, size = 0x2000, scoped, tag = 'scoped mem for output reshape']
    %s2 = smov 3
    %v3 = vld [vmem:[%s0] ss:$8 sm:%s2]
    %vm4 = vcmask 130048
    %5 = vst.msk [vmem:[#allocation0] ss:$8 sm:$0x3] %vm4, %v3
    %s6 = scalar_lea.vmem %s0, 7
    %s7 = smov 3
    %v8 = vld [vmem:[%s6] ss:$8 sm:%s7]
    %9 = vrot.lane.b32.xlu0 %v8, 112
    %v10 = vpop.permute.xlu0 %9
    %vm11 = vcmask 1048448
    %12 = vst.msk [vmem:[#allocation0] ss:$8 sm:$0x3] %vm11, %v10
    %s13 = scalar_lea.vmem %s0, 6
    %s14 = smov 3
    %v15 = vld [vmem:[%s13] ss:$8 sm:%s14]
    %16 = vrot.lane.b32.xlu0 %v15, 96
    %v17 = vpop.permute.xlu0 %16
    %vm18 = vcmask 917248
    %19 = vst.msk [vmem:[#allocation0] ss:$8 sm:$0x3] %vm18, %v17
    %s20 = scalar_lea.vmem %s0, 5
    %s21 = smov 3
    %v22 = vld [vmem:[%s20] ss:$8 sm:%s21]
    %23 = vrot.lane.b32.xlu0 %v22, 80
    %v24 = vpop.permute.xlu0 %23
    %vm25 = vcmask 786048
    %26 = vst.msk [vmem:[#allocation0] ss:$8 sm:$0x3] %vm25, %v24
    %s27 = scalar_lea.vmem %s0, 4
    %s28 = smov 3
    %v29 = vld [vmem:[%s27] ss:$8 sm:%s28]
    %30 = vrot.lane.b32.xlu0 %v29, 64
    %v31 = vpop.permute.xlu0 %30
    %vm32 = vcmask 654848
    %33 = vst.msk [vmem:[#allocation0] ss:$8 sm:$0x3] %vm32, %v31
    %s34 = scalar_lea.vmem %s0, 3
    %s35 = smov 3
    %v36 = vld [vmem:[%s34] ss:$8 sm:%s35]
    %37 = vrot.lane.b32.xlu0 %v36, 48
    %v38 = vpop.permute.xlu0 %37
    %vm39 = vcmask 523648
    %40 = vst.msk [vmem:[#allocation0] ss:$8 sm:$0x3] %vm39, %v38
    %s41 = scalar_lea.vmem %s0, 2
    %s42 = smov 3
    %v43 = vld [vmem:[%s41] ss:$8 sm:%s42]
    %44 = vrot.lane.b32.xlu0 %v43, 32
    %v45 = vpop.permute.xlu0 %44
    %vm46 = vcmask 392448
    %47 = vst.msk [vmem:[#allocation0] ss:$8 sm:$0x3] %vm46, %v45
    %s48 = scalar_lea.vmem %s0, 1
    %s49 = smov 3
    %v50 = vld [vmem:[%s48] ss:$8 sm:%s49]
    %51 = vrot.lane.b32.xlu0 %v50, 16
    %v52 = vpop.permute.xlu0 %51
    %vm53 = vcmask 261248
    %54 = vst.msk [vmem:[#allocation0] ss:$8 sm:$0x3] %vm53, %v52
    %s56 = sshllo.u32 0, 1
    %v58 = vld [vmem:[#allocation0] sm:%s56]
    %s59 = sshllo.u32 0, 1
    %60 = vst [vmem:[%s1] sm:%s59] %v58
    %s61 = scalar_lea.vmem [#allocation0], 8
    %v62 = vld [vmem:[%s61] sm:%s56]
    %s63 = sshllo.u32 0, 1
    %s64 = scalar_lea.vmem %s1, 1
    %65 = vst [vmem:[%s64] sm:%s63] %v62

// kernel: double_conv_pallas.1
$region0: #{double_conv_pallas.1}
  #allocation0 [shape = 'u32[]', space=smem, size = 0x4, offset = 0x4, fixed_abs, tag = 'smem constant byte address 0x4 - core index']
  #allocation1 [shape = 'u32[144,128]{1,0:T(1,128)}', space=vmem, size = 0x12000, scoped, tag = 'internal scratch']
  #allocation2 [shape = 'f32[8,256]{1,0:T(8,128)}', space=vmem, size = 0x2000, scoped, tag = 'scratch operand']
  %s0 = inlined_call_operand.vmem [shape: f32[2,4,256], index: 0, kind: input, shape index: {}]
  %s1 = inlined_call_operand.vmem [shape: s32[1,256], index: 1, kind: input, shape index: {}]
  %s2 = inlined_call_operand.vmem [shape: f32[8,36], index: 2, kind: input, shape index: {}]
  %s3 = inlined_call_operand.vmem [shape: f32[8,1], index: 3, kind: input, shape index: {}]
  %s4 = inlined_call_operand.vmem [shape: f32[8,1], index: 4, kind: input, shape index: {}]
  %s5 = inlined_call_operand.vmem [shape: f32[8,72], index: 5, kind: input, shape index: {}]
  %s6 = inlined_call_operand.vmem [shape: f32[8,1], index: 6, kind: input, shape index: {}]
  %s7 = inlined_call_operand.vmem [shape: f32[8,1], index: 7, kind: input, shape index: {}]
  %s8 = inlined_call_operand.vmem [shape: f32[2,8,256], index: 8, kind: output, shape index: {}]
  %s9 = sld [smem:[#allocation0]]
  $region65: #{double_conv_pallas.1} parent=0
    _
  %s11 = ssub.s32 1, %s9
  %s12 = scalar_select 0, %s11, %s9
  loop: start=0, step=1, limit=4
  $region2: #{double_conv_pallas.1} parent=0 // loop_pre_header
    _
  $region3: #{double_conv_pallas.1} parent=0 // loop_header
    %s14 = sphi 0, %s18
    %p15 = scmp.ge.s32.totalorder %s14, 4
    %s24 = sphi 0, %s26
    %s27 = sphi 0, %s24
    %s28 = sphi 0, %s27
    %s44 = sphi 0, %s28
    %s48 = sphi 0, %s48
    %s50 = sphi 0, %s48
    %s51 = sphi 0, %s50
    %s65 = sphi 0, %s51
    %s69 = sphi 0, %s69
    %s71 = sphi 0, %s69
    %s72 = sphi 0, %s71
    %s86 = sphi 0, %s72
    %s90 = sphi 0, %s90
    %s92 = sphi 0, %s90
    %s93 = sphi 0, %s92
    %s107 = sphi 0, %s93
    %s111 = sphi 0, %s111
    %s113 = sphi 0, %s111
    %s114 = sphi 0, %s113
    %s128 = sphi 0, %s114
    %s132 = sphi 0, %s132
    %s134 = sphi 0, %s132
    %s135 = sphi 0, %s134
    %s149 = sphi 0, %s135
    %s153 = sphi 0, %s153
    %s155 = sphi 0, %s153
    %s156 = sphi 0, %s155
    %s170 = sphi 0, %s156
    %s174 = sphi 0, %s174
    %s176 = sphi 0, %s174
    %s177 = sphi 0, %s176
    %s191 = sphi 0, %s177
    %s197 = sphi 0, %s199
    %s200 = sphi 0, %s197
    %s201 = sphi 0, %s200
    %s217 = sphi 0, %s201
  $region4: #{double_conv_pallas.1} parent=0 // loop_header_branch
    %17 = sbr.rel (%p15) target = $region8
  $region5: #{double_conv_pallas.1} parent=0 // loop_body
    %s19 = ssub.s32 %s14, 1
    %s20 = ssub.s32 %s14, 2
    %s21 = sadd.s32 %s14, 1
    %s22 = ssub.s32 %s14, %s21
    %p23 = scmp.eq.s32.totalorder %s22, 0
    %s25 = sadd.s32 %s24, 1
    %s26 = scalar_select %p23, %s24, %s25
    %p29 = pneg %p23
    %p30 = scmp.eq.s32.totalorder %s14, 1
    %p31 = por %p29, %p30
    %p32 = scmp.ne.s32.totalorder %s24, %s27
    %p33 = scmp.eq.s32.totalorder %s14, 0
    %p34 = por %p32, %p33
    %p35 = scmp.ne.s32.totalorder %s24, %s27
    %p36 = scmp.eq.s32.totalorder %s19, 1
    %p37 = por %p35, %p36
    %p38 = scmp.ne.s32.totalorder %s27, %s28
    %p39 = scmp.eq.s32.totalorder %s19, 0
    %p40 = por %p38, %p39
    %p41 = scmp.ne.s32.totalorder %s27, %s28
    %p42 = scmp.eq.s32.totalorder %s20, 1
    %p43 = por %p41, %p42
    %p45 = scmp.ne.s32.totalorder %s28, %s44
    %p46 = scmp.eq.s32.totalorder %s20, 0
    %p47 = por %p45, %p46
    %s49 = sadd.s32 %s48, 1
    %p52 = scmp.eq.s32.totalorder %s14, 1
    %p53 = scmp.ne.s32.totalorder %s48, %s50
    %p54 = scmp.eq.s32.totalorder %s14, 0
    %p55 = por %p53, %p54
    %p56 = scmp.ne.s32.totalorder %s48, %s50
    %p57 = scmp.eq.s32.totalorder %s19, 1
    %p58 = por %p56, %p57
    %p59 = scmp.ne.s32.totalorder %s50, %s51
    %p60 = scmp.eq.s32.totalorder %s19, 0
    %p61 = por %p59, %p60
    %p62 = scmp.ne.s32.totalorder %s50, %s51
    %p63 = scmp.eq.s32.totalorder %s20, 1
    %p64 = por %p62, %p63
    %p66 = scmp.ne.s32.totalorder %s51, %s65
    %p67 = scmp.eq.s32.totalorder %s20, 0
    %p68 = por %p66, %p67
    %s70 = sadd.s32 %s69, 1
    %p73 = scmp.eq.s32.totalorder %s14, 1
    %p74 = scmp.ne.s32.totalorder %s69, %s71
    %p75 = scmp.eq.s32.totalorder %s14, 0
    %p76 = por %p74, %p75
    %p77 = scmp.ne.s32.totalorder %s69, %s71
    %p78 = scmp.eq.s32.totalorder %s19, 1
    %p79 = por %p77, %p78
    %p80 = scmp.ne.s32.totalorder %s71, %s72
    %p81 = scmp.eq.s32.totalorder %s19, 0
    %p82 = por %p80, %p81
    %p83 = scmp.ne.s32.totalorder %s71, %s72
    %p84 = scmp.eq.s32.totalorder %s20, 1
    %p85 = por %p83, %p84
    %p87 = scmp.ne.s32.totalorder %s72, %s86
    %p88 = scmp.eq.s32.totalorder %s20, 0
    %p89 = por %p87, %p88
    %s91 = sadd.s32 %s90, 1
    %p94 = scmp.eq.s32.totalorder %s14, 1
    %p95 = scmp.ne.s32.totalorder %s90, %s92
    %p96 = scmp.eq.s32.totalorder %s14, 0
    %p97 = por %p95, %p96
    %p98 = scmp.ne.s32.totalorder %s90, %s92
    %p99 = scmp.eq.s32.totalorder %s19, 1
    %p100 = por %p98, %p99
    %p101 = scmp.ne.s32.totalorder %s92, %s93
    %p102 = scmp.eq.s32.totalorder %s19, 0
    %p103 = por %p101, %p102
    %p104 = scmp.ne.s32.totalorder %s92, %s93
    %p105 = scmp.eq.s32.totalorder %s20, 1
    %p106 = por %p104, %p105
    %p108 = scmp.ne.s32.totalorder %s93, %s107
    %p109 = scmp.eq.s32.totalorder %s20, 0
    %p110 = por %p108, %p109
    %s112 = sadd.s32 %s111, 1
    %p115 = scmp.eq.s32.totalorder %s14, 1
    %p116 = scmp.ne.s32.totalorder %s111, %s113
    %p117 = scmp.eq.s32.totalorder %s14, 0
    %p118 = por %p116, %p117
    %p119 = scmp.ne.s32.totalorder %s111, %s113
    %p120 = scmp.eq.s32.totalorder %s19, 1
    %p121 = por %p119, %p120
    %p122 = scmp.ne.s32.totalorder %s113, %s114
    %p123 = scmp.eq.s32.totalorder %s19, 0
    %p124 = por %p122, %p123
    %p125 = scmp.ne.s32.totalorder %s113, %s114
    %p126 = scmp.eq.s32.totalorder %s20, 1
    %p127 = por %p125, %p126
    %p129 = scmp.ne.s32.totalorder %s114, %s128
    %p130 = scmp.eq.s32.totalorder %s20, 0
    %p131 = por %p129, %p130
    %s133 = sadd.s32 %s132, 1
    %p136 = scmp.eq.s32.totalorder %s14, 1
    %p137 = scmp.ne.s32.totalorder %s132, %s134
    %p138 = scmp.eq.s32.totalorder %s14, 0
    %p139 = por %p137, %p138
    %p140 = scmp.ne.s32.totalorder %s132, %s134
    %p141 = scmp.eq.s32.totalorder %s19, 1
    %p142 = por %p140, %p141
    %p143 = scmp.ne.s32.totalorder %s134, %s135
    %p144 = scmp.eq.s32.totalorder %s19, 0
    %p145 = por %p143, %p144
    %p146 = scmp.ne.s32.totalorder %s134, %s135
    %p147 = scmp.eq.s32.totalorder %s20, 1
    %p148 = por %p146, %p147
    %p150 = scmp.ne.s32.totalorder %s135, %s149
    %p151 = scmp.eq.s32.totalorder %s20, 0
    %p152 = por %p150, %p151
    %s154 = sadd.s32 %s153, 1
    %p157 = scmp.eq.s32.totalorder %s14, 1
    %p158 = scmp.ne.s32.totalorder %s153, %s155
    %p159 = scmp.eq.s32.totalorder %s14, 0
    %p160 = por %p158, %p159
    %p161 = scmp.ne.s32.totalorder %s153, %s155
    %p162 = scmp.eq.s32.totalorder %s19, 1
    %p163 = por %p161, %p162
    %p164 = scmp.ne.s32.totalorder %s155, %s156
    %p165 = scmp.eq.s32.totalorder %s19, 0
    %p166 = por %p164, %p165
    %p167 = scmp.ne.s32.totalorder %s155, %s156
    %p168 = scmp.eq.s32.totalorder %s20, 1
    %p169 = por %p167, %p168
    %p171 = scmp.ne.s32.totalorder %s156, %s170
    %p172 = scmp.eq.s32.totalorder %s20, 0
    %p173 = por %p171, %p172
    %s175 = sadd.s32 %s174, 1
    %p178 = scmp.eq.s32.totalorder %s14, 1
    %p179 = scmp.ne.s32.totalorder %s174, %s176
    %p180 = scmp.eq.s32.totalorder %s14, 0
    %p181 = por %p179, %p180
    %p182 = scmp.ne.s32.totalorder %s174, %s176
    %p183 = scmp.eq.s32.totalorder %s19, 1
    %p184 = por %p182, %p183
    %p185 = scmp.ne.s32.totalorder %s176, %s177
    %p186 = scmp.eq.s32.totalorder %s19, 0
    %p187 = por %p185, %p186
    %p188 = scmp.ne.s32.totalorder %s176, %s177
    %p189 = scmp.eq.s32.totalorder %s20, 1
    %p190 = por %p188, %p189
    %p192 = scmp.ne.s32.totalorder %s177, %s191
    %p193 = scmp.eq.s32.totalorder %s20, 0
    %p194 = por %p192, %p193
    %s195 = ssub.s32 %s14, %s21
    %p196 = scmp.eq.s32.totalorder %s195, 0
    %s198 = sadd.s32 %s197, 1
    %s199 = scalar_select %p196, %s197, %s198
    %p202 = pneg %p196
    %p203 = scmp.eq.s32.totalorder %s14, 1
    %p204 = por %p202, %p203
    %p205 = scmp.ne.s32.totalorder %s197, %s200
    %p206 = scmp.eq.s32.totalorder %s14, 0
    %p207 = por %p205, %p206
    %p208 = scmp.ne.s32.totalorder %s197, %s200
    %p209 = scmp.eq.s32.totalorder %s19, 1
    %p210 = por %p208, %p209
    %p211 = scmp.ne.s32.totalorder %s200, %s201
    %p212 = scmp.eq.s32.totalorder %s19, 0
    %p213 = por %p211, %p212
    %p214 = scmp.ne.s32.totalorder %s200, %s201
    %p215 = scmp.eq.s32.totalorder %s20, 1
    %p216 = por %p214, %p215
    %p218 = scmp.ne.s32.totalorder %s201, %s217
    %p219 = scmp.eq.s32.totalorder %s20, 0
    %p220 = por %p218, %p219
    %p221 = scmp.le.s32.totalorder 1, %s14
    %p222 = scmp.lt.s32.totalorder %s14, 3
    %p223 = pnand %p221, %p222
    %p224 = pneg %p223
    // Predicated region
    $region9: #{double_conv_pallas.1} parent=5 // pred_check
      _
    $region10: #{double_conv_pallas.1} parent=5 // pred_check_branch
      %226 = sbr.rel (%p223) target = $region12
    $region11: #{double_conv_pallas.1} parent=5 // pred_region
      %s227 = ssub.s32 %s14, 1
      // Predicated region
      $region13: #{double_conv_pallas.1} parent=11 // pred_check
        %p228 = pneg %p61
      $region14: #{double_conv_pallas.1} parent=11 // pred_check_branch
        %230 = sbr.rel (%p228) target = $region16
      $region15: #{double_conv_pallas.1} parent=11 // pred_region
        _
      $region16: #{double_conv_pallas.1} parent=11 // pred_fallthru
        _
      // Predicated region
      $region17: #{double_conv_pallas.1} parent=11 // pred_check
        %p231 = pneg %p82
      $region18: #{double_conv_pallas.1} parent=11 // pred_check_branch
        %233 = sbr.rel (%p231) target = $region20
      $region19: #{double_conv_pallas.1} parent=11 // pred_region
        _
      $region20: #{double_conv_pallas.1} parent=11 // pred_fallthru
        _
      // Predicated region
      $region21: #{double_conv_pallas.1} parent=11 // pred_check
        %p234 = pneg %p103
      $region22: #{double_conv_pallas.1} parent=11 // pred_check_branch
        %236 = sbr.rel (%p234) target = $region24
      $region23: #{double_conv_pallas.1} parent=11 // pred_region
        _
      $region24: #{double_conv_pallas.1} parent=11 // pred_fallthru
        _
      // Predicated region
      $region25: #{double_conv_pallas.1} parent=11 // pred_check
        %p237 = pneg %p124
      $region26: #{double_conv_pallas.1} parent=11 // pred_check_branch
        %239 = sbr.rel (%p237) target = $region28
      $region27: #{double_conv_pallas.1} parent=11 // pred_region
        _
      $region28: #{double_conv_pallas.1} parent=11 // pred_fallthru
        _
      // Predicated region
      $region29: #{double_conv_pallas.1} parent=11 // pred_check
        %p240 = pneg %p145
      $region30: #{double_conv_pallas.1} parent=11 // pred_check_branch
        %242 = sbr.rel (%p240) target = $region32
      $region31: #{double_conv_pallas.1} parent=11 // pred_region
        _
      $region32: #{double_conv_pallas.1} parent=11 // pred_fallthru
        _
      // Predicated region
      $region33: #{double_conv_pallas.1} parent=11 // pred_check
        %p243 = pneg %p166
      $region34: #{double_conv_pallas.1} parent=11 // pred_check_branch
        %245 = sbr.rel (%p243) target = $region36
      $region35: #{double_conv_pallas.1} parent=11 // pred_region
        _
      $region36: #{double_conv_pallas.1} parent=11 // pred_fallthru
        _
      // Predicated region
      $region37: #{double_conv_pallas.1} parent=11 // pred_check
        %p246 = pneg %p187
      $region38: #{double_conv_pallas.1} parent=11 // pred_check_branch
        %248 = sbr.rel (%p246) target = $region40
      $region39: #{double_conv_pallas.1} parent=11 // pred_region
        _
      $region40: #{double_conv_pallas.1} parent=11 // pred_fallthru
        _
    $region12: #{double_conv_pallas.1} parent=5 // pred_fallthru
      _
    %p249 = scmp.lt.s32.totalorder %s14, 2
    // Predicated region
    $region41: #{double_conv_pallas.1} parent=5 // pred_check
      %p250 = pneg %p249
    $region42: #{double_conv_pallas.1} parent=5 // pred_check_branch
      %252 = sbr.rel (%p250) target = $region44
    $region43: #{double_conv_pallas.1} parent=5 // pred_region
      // Predicated region
      $region45: #{double_conv_pallas.1} parent=43 // pred_check
        %p253 = pneg %p34
      $region46: #{double_conv_pallas.1} parent=43 // pred_check_branch
        %255 = sbr.rel (%p253) target = $region48
      $region47: #{double_conv_pallas.1} parent=43 // pred_region
        %p256 = scmp.lt.s32.totalorder %s14, 1
        %s257 = scalar_select %p256, %s14, 1
        %s258 = smul.addr %s257, 2
        %s259 = smul.addr %s258, 4
        %s260 = scalar_lea.vmem %s0, %s259
      $region48: #{double_conv_pallas.1} parent=43 // pred_fallthru
        _
    $region44: #{double_conv_pallas.1} parent=5 // pred_fallthru
      _
    %p261 = scmp.le.s32.totalorder 1, %s14
    %p262 = scmp.lt.s32.totalorder %s14, 3
    %p263 = pnand %p261, %p262
    %p264 = pneg %p263
    // Predicated region
    $region49: #{double_conv_pallas.1} parent=5 // pred_check
      _
    $region50: #{double_conv_pallas.1} parent=5 // pred_check_branch
      %266 = sbr.rel (%p263) target = $region52
    $region51: #{double_conv_pallas.1} parent=5 // pred_region
      %s267 = ssub.s32 %s14, 1
      %p268 = scmp.lt.s32.totalorder %s19, 1
      %s269 = scalar_select %p268, %s19, 1
      %s270 = smul.addr %s269, 2
      %s271 = smul.addr %s270, 4
      %s272 = scalar_lea.vmem %s0, %s271
      %p273 = pneg %p40
      %p274 = pneg %p37
      %p275 = pneg %p61
      %p276 = pneg %p58
      %p277 = pneg %p82
      %p278 = pneg %p79
      %p279 = pneg %p103
      %p280 = pneg %p100
      %p281 = pneg %p124
      %p282 = pneg %p121
      %p283 = pneg %p145
      %p284 = pneg %p142
      %p285 = pneg %p166
      %p286 = pneg %p163
      %p287 = pneg %p187
      %p288 = pneg %p184
      %p289 = pneg %p213
      %p290 = pneg %p210
      %p291 = scmp.lt.s32.totalorder %s19, 1
      %s292 = scalar_select %p291, %s19, 1
      %s293 = smul.addr %s292, 2
      %s294 = smul.addr %s293, 8
      %s295 = scalar_lea.vmem %s8, %s294
      %p296 = scmp.lt.s32.totalorder %s19, 1
      %s297 = scalar_select %p296, %s19, 1
      %s298 = smul.addr %s297, 2
      %s299 = smul.addr %s298, 4
      %s300 = scalar_lea.vmem %s0, %s299
      %p301 = scmp.lt.s32.totalorder %s19, 1
      %s302 = scalar_select %p301, %s19, 1
      %s303 = smul.addr %s302, 2
      %s304 = smul.addr %s303, 8
      %s305 = scalar_lea.vmem %s8, %s304
      %v306 = vlaneseq
      %v307 = vand.u32 %v306, 127
      %v308 = vadd.s32 %v307, 128
      %v309 = vld [vmem:[%s1] sm:$0x3]
      %vm310 = vcmp.ge.s32.totalorder %v307, 16
      %vm311 = vcmp.ge.s32.totalorder %v308, 16
      %vm312 = vcmp.lt.s32.totalorder %v307, 240
      %vm313 = vcmp.lt.s32.totalorder %v308, 240
      %vm314 = vcmp.ge.s32.totalorder %v309, 1
      %vm315 = vcmp.lt.s32.totalorder %v309, 15
      %v316 = vsel %vm314, 1, 0
      %v317 = vlaneseq
      %v318 = vshrl.u32 %v317, 7
      %v319 = vsub.s32 0, %v318
      %v320 = vrot.slane %v316, %v319
      %v321 = vlaneseq
      %v322 = vshrl.u32 %v321, 7
      %v323 = vsub.s32 1, %v322
      %v324 = vrot.slane %v316, %v323
      %vm325 = vcmp.ne.s32.totalorder %v320, 0
      %vm326 = vcmp.ne.s32.totalorder %v324, 0
      %vm327 = vmand %vm310, %vm325
      %vm328 = vmand %vm311, %vm326
      %v329 = vsel %vm327, 1, 0
      %v330 = vsel %vm328, 1, 0
      %v331 = vcvt.s32.f32 %v329
      %v332 = vcvt.s32.f32 %v330
      %v333 = vsel %vm310, 1, 0
      %v334 = vsel %vm311, 1, 0
      %v335 = vcvt.s32.f32 %v333
      %v336 = vcvt.s32.f32 %v334
      %v337 = vsel %vm315, 1, 0
      %v338 = vlaneseq
      %v339 = vshrl.u32 %v338, 7
      %v340 = vsub.s32 0, %v339
      %v341 = vrot.slane %v337, %v340
      %v342 = vlaneseq
      %v343 = vshrl.u32 %v342, 7
      %v344 = vsub.s32 1, %v343
      %v345 = vrot.slane %v337, %v344
      %vm346 = vcmp.ne.s32.totalorder %v341, 0
      %vm347 = vcmp.ne.s32.totalorder %v345, 0
      %vm348 = vmand %vm310, %vm346
      %vm349 = vmand %vm311, %vm347
      %v350 = vsel %vm348, 1, 0
      %v351 = vsel %vm349, 1, 0
      %v352 = vcvt.s32.f32 %v350
      %v353 = vcvt.s32.f32 %v351
      %v354 = vcvt.s32.f32 %v316
      %v355 = vcvt.s32.f32 %v337
      %vm356 = vmand %vm312, %vm325
      %vm357 = vmand %vm313, %vm326
      %v358 = vsel %vm356, 1, 0
      %v359 = vsel %vm357, 1, 0
      %v360 = vcvt.s32.f32 %v358
      %v361 = vcvt.s32.f32 %v359
      %v362 = vsel %vm312, 1, 0
      %v363 = vsel %vm313, 1, 0
      %v364 = vcvt.s32.f32 %v362
      %v365 = vcvt.s32.f32 %v363
      %vm366 = vmand %vm312, %vm346
      %vm367 = vmand %vm313, %vm347
      %v368 = vsel %vm366, 1, 0
      %v369 = vsel %vm367, 1, 0
      %v370 = vcvt.s32.f32 %v368
      %v371 = vcvt.s32.f32 %v369
      %v372 = vld [vmem:[%s2] sm:$0xff]
      %v373 = vld [vmem:[%s5] sm:$0xff]
      %v374 = vld [vmem:[%s3] sm:$0xff]
      %v375 = vld [vmem:[%s4] sm:$0xff]
      %v376 = vld [vmem:[%s6] sm:$0xff]
      %v377 = vld [vmem:[%s7] sm:$0xff]
      %v378 = vld [vmem:[%s300] sm:$0xff]
      %v380 = vcombine.high %v378, %v378
      %382 = vrot.lane.b32.xlu0 %v378, 17
      %v383 = vpop.permute.xlu0 %382
      %384 = vrot.lane.b32.xlu0 %v380, 17
      %v385 = vpop.permute.xlu0 %384
      %vm386 = vcmp.lt.s32.totalorder %v307, 17
      %v387 = vsel %vm386, %v383, %v385
      %v388 = vsel %vm386, %v385, %v383
      %v389 = vlaneseq
      %v390 = vshrl.u32 %v389, 7
      %v391 = vsub.s32 0, %v390
      %v392 = vrot.slane %v331, %v391
      %v393 = vlaneseq
      %v394 = vshrl.u32 %v393, 7
      %v395 = vsub.s32 0, %v394
      %v396 = vrot.slane %v332, %v395
      %v397 = vmul.f32 %v388, %v392
      %v398 = vmul.f32 %v387, %v396
      %399 = vrot.lane.b32.xlu0 %v378, 16
      %v400 = vpop.permute.xlu0 %399
      %401 = vrot.lane.b32.xlu0 %v380, 16
      %v402 = vpop.permute.xlu0 %401
      %vm403 = vcmp.lt.s32.totalorder %v307, 16
      %v404 = vsel %vm403, %v400, %v402
      %v405 = vsel %vm403, %v402, %v400
      %v406 = vmul.f32 %v405, %v335
      %v407 = vmul.f32 %v404, %v336
      %408 = vrot.lane.b32.xlu0 %v378, 15
      %v409 = vpop.permute.xlu0 %408
      %410 = vrot.lane.b32.xlu0 %v380, 15
      %v411 = vpop.permute.xlu0 %410
      %vm412 = vcmp.lt.s32.totalorder %v307, 15
      %v413 = vsel %vm412, %v409, %v411
      %v414 = vsel %vm412, %v411, %v409
      %v415 = vlaneseq
      %v416 = vshrl.u32 %v415, 7
      %v417 = vsub.s32 0, %v416
      %v418 = vrot.slane %v352, %v417
      %v419 = vlaneseq
      %v420 = vshrl.u32 %v419, 7
      %v421 = vsub.s32 0, %v420
      %v422 = vrot.slane %v353, %v421
      %v423 = vmul.f32 %v414, %v418
      %v424 = vmul.f32 %v413, %v422
      %425 = vrot.lane.b32.xlu0 %v378, 1
      %v426 = vpop.permute.xlu0 %425
      %427 = vrot.lane.b32.xlu0 %v380, 1
      %v428 = vpop.permute.xlu0 %427
      %vm429 = vcmp.lt.s32.totalorder %v307, 1
      %v430 = vsel %vm429, %v426, %v428
      %v431 = vsel %vm429, %v428, %v426
      %v433 = vlaneseq
      %v434 = vshrl.u32 %v433, 7
      %v435 = vsub.s32 0, %v434
      %v436 = vrot.slane %v354, %v435
      %v437 = vlaneseq
      %v438 = vshrl.u32 %v437, 7
      %v439 = vsub.s32 1, %v438
      %v440 = vrot.slane %v354, %v439
      %v443 = vmul.f32 %v431, %v436
      %v444 = vmul.f32 %v430, %v440
      %445 = vrot.lane.b32.xlu0 %v378, 127
      %v446 = vpop.permute.xlu0 %445
      %447 = vrot.lane.b32.xlu0 %v380, 127
      %v448 = vpop.permute.xlu0 %447
      %vm449 = vcmp.lt.s32.totalorder %v307, 127
      %v450 = vsel %vm449, %v446, %v448
      %v451 = vsel %vm449, %v448, %v446
      %v453 = vlaneseq
      %v454 = vshrl.u32 %v453, 7
      %v455 = vsub.s32 0, %v454
      %v456 = vrot.slane %v355, %v455
      %v457 = vlaneseq
      %v458 = vshrl.u32 %v457, 7
      %v459 = vsub.s32 1, %v458
      %v460 = vrot.slane %v355, %v459
      %v463 = vmul.f32 %v450, %v456
      %v464 = vmul.f32 %v451, %v460
      %465 = vrot.lane.b32.xlu0 %v378, 113
      %v466 = vpop.permute.xlu0 %465
      %467 = vrot.lane.b32.xlu0 %v380, 113
      %v468 = vpop.permute.xlu0 %467
      %vm469 = vcmp.lt.s32.totalorder %v307, 113
      %v470 = vsel %vm469, %v466, %v468
      %v471 = vsel %vm469, %v468, %v466
      %v472 = vlaneseq
      %v473 = vshrl.u32 %v472, 7
      %v474 = vsub.s32 0, %v473
      %v475 = vrot.slane %v360, %v474
      %v476 = vlaneseq
      %v477 = vshrl.u32 %v476, 7
      %v478 = vsub.s32 0, %v477
      %v479 = vrot.slane %v361, %v478
      %v480 = vmul.f32 %v470, %v475
      %v481 = vmul.f32 %v471, %v479
      %482 = vrot.lane.b32.xlu0 %v378, 112
      %v483 = vpop.permute.xlu0 %482
      %484 = vrot.lane.b32.xlu0 %v380, 112
      %v485 = vpop.permute.xlu0 %484
      %vm486 = vcmp.lt.s32.totalorder %v307, 112
      %v487 = vsel %vm486, %v483, %v485
      %v488 = vsel %vm486, %v485, %v483
      %v489 = vmul.f32 %v487, %v364
      %v490 = vmul.f32 %v488, %v365
      %491 = vrot.lane.b32.xlu0 %v378, 111
      %v492 = vpop.permute.xlu0 %491
      %493 = vrot.lane.b32.xlu0 %v380, 111
      %v494 = vpop.permute.xlu0 %493
      %vm495 = vcmp.lt.s32.totalorder %v307, 111
      %v496 = vsel %vm495, %v492, %v494
      %v497 = vsel %vm495, %v494, %v492
      %v498 = vlaneseq
      %v499 = vshrl.u32 %v498, 7
      %v500 = vsub.s32 0, %v499
      %v501 = vrot.slane %v370, %v500
      %v502 = vlaneseq
      %v503 = vshrl.u32 %v502, 7
      %v504 = vsub.s32 0, %v503
      %v505 = vrot.slane %v371, %v504
      %v506 = vmul.f32 %v496, %v501
      %v507 = vmul.f32 %v497, %v505
      %v510 = vrot.slane %v406, 4
      %v511 = vrot.slane %v407, 4
      %v516 = vrot.slane %v443, 4
      %v517 = vrot.slane %v444, 4
      %v522 = vrot.slane %v463, 4
      %v523 = vrot.slane %v464, 4
      %v528 = vrot.slane %v489, 4
      %v529 = vrot.slane %v490, 4
      %vm532 = vcmask 1043456
      %v533 = vsel %vm532, %v397, %v510
      %v534 = vsel %vm532, %v398, %v511
      %v535 = vsel %vm532, %v423, %v516
      %v536 = vsel %vm532, %v424, %v517
      %v537 = vsel %vm532, %v378, %v522
      %v538 = vsel %vm532, %v380, %v523
      %v539 = vsel %vm532, %v480, %v528
      %v540 = vsel %vm532, %v481, %v529
      %vm541 = vcmask 293888
      %v543 = vsel %vm541, %v372, 0
      %v546 = vsel %vm532, %v506, 0
      %v549 = vsel %vm532, %v507, 0
      %v551 = vand.u32 %v534, 4294901760
      %552 = vmatprep.subr.mxu0 %v551
      %v553 = vand.u32 %v533, 4294901760
      %554 = vmatpush1.msra.mxu0 %v553
      %v555 = vand.u32 %v536, 4294901760
      %556 = vmatprep.subr.mxu0 %v555
      %v557 = vand.u32 %v535, 4294901760
      %558 = vmatpush1.msra.mxu0 %v557
      %v559 = vand.u32 %v538, 4294901760
      %560 = vmatprep.subr.mxu0 %v559
      %v561 = vand.u32 %v537, 4294901760
      %562 = vmatpush1.msra.mxu0 %v561
      %v563 = vand.u32 %v540, 4294901760
      %564 = vmatprep.subr.mxu0 %v563
      %v565 = vand.u32 %v539, 4294901760
      %566 = vmatpush1.msra.mxu0 %v565
      %v567 = vand.u32 %v549, 4294901760
      %568 = vmatprep.subr.mxu0 %v567
      %v569 = vand.u32 %v546, 4294901760
      %570 = vmatpush1.msra.mxu0 %v569
      %571 = vmatprep.subr.mxu0 0.0
      %572 = vmatpush1.msra.mxu0 0.0
      %573 = vmatprep.subr.mxu0 0.0
      %574 = vmatpush1.msra.mxu0 0.0
      %575 = vmatprep.subr.mxu0 0.0
      %576 = vmatpush1.msra.mxu0 0.0
      %577 = vmatprep.subr.mxu0 0.0
      %578 = vmatpush1.msra.mxu0 0.0
      %579 = vmatprep.subr.mxu0 0.0
      %580 = vmatpush1.msra.mxu0 0.0
      %581 = vmatprep.subr.mxu0 0.0
      %582 = vmatpush1.msra.mxu0 0.0
      %583 = vmatprep.subr.mxu0 0.0
      %584 = vmatpush1.msra.mxu0 0.0
      %585 = vmatprep.subr.mxu0 0.0
      %586 = vmatpush1.msra.mxu0 0.0
      %587 = vmatprep.subr.mxu0 0.0
      %588 = vmatpush1.msra.mxu0 0.0
      %589 = vmatprep.subr.mxu0 0.0
      %590 = vmatpush1.msra.mxu0 0.0
      %591 = vmatprep.subr.mxu0 0.0
      %592 = vmatpush1.msra.mxu0 0.0
      %593 = vmatprep.subr.mxu0 0.0
      %594 = vmatpush1.msra.mxu0 0.0
      %595 = vmatprep.subr.mxu0 0.0
      %596 = vmatpush1.msra.mxu0 0.0
      %597 = vmatprep.subr.mxu0 0.0
      %598 = vmatpush1.msra.mxu0 0.0
      %599 = vmatprep.subr.mxu0 0.0
      %600 = vmatpush1.msra.mxu0 0.0
      %601 = vmatprep.subr.mxu0 0.0
      %602 = vmatpush1.msra.mxu0 0.0
      %603 = vmatprep.subr.mxu0 0.0
      %604 = vmatpush1.msra.mxu0 0.0
      %605 = vmatprep.subr.mxu0 0.0
      %606 = vmatpush1.msra.mxu0 0.0
      %607 = vmatprep.subr.mxu0 0.0
      %608 = vmatpush1.msra.mxu0 0.0
      %609 = vmatprep.subr.mxu0 0.0
      %610 = vmatpush1.msra.mxu0 0.0
      %611 = vmatprep.subr.mxu0 0.0
      %612 = vmatpush1.msra.mxu0 0.0
      %613 = vmatprep.subr.mxu0 0.0
      %614 = vmatpush1.msra.mxu0 0.0
      %615 = vmatprep.subr.mxu0 0.0
      %616 = vmatpush1.msra.mxu0 0.0
      %617 = vmatprep.subr.mxu0 0.0
      %618 = vmatpush1.msra.mxu0 0.0
      %619 = vmatprep.subr.mxu0 0.0
      %620 = vmatpush1.msra.mxu0 0.0
      %621 = vmatprep.subr.mxu0 0.0
      %622 = vmatpush1.msra.mxu0 0.0
      %623 = vmatprep.subr.mxu0 0.0
      %624 = vmatpush1.msra.mxu0 0.0
      %625 = vmatprep.mubr.f32.mxu0 0.0
      %v626 = vand.u32 %v543, 4294901760
      %v627 = vsub.f32 %v543, %v626
      %v628 = vand.u32 %v627, 4294901760
      %v629 = vsub.f32 %v627, %v628
      %v630 = vand.u32 %v629, 4294901760
      %631 = vmatmul.mubr.f32.gmra.mrb[0].mxu0 %v630
      %v632 = vpop.f32.mrb[0].mxu0
      %v633 = vadd.f32 0.0, %v632
      %v634 = vpop.f32.mrb[0].mxu0
      %v635 = vadd.f32 0.0, %v634
      %636 = vdwg.mxu0
      %v637 = vand.u32 %v534, 4294901760
      %v638 = vsub.f32 %v534, %v637
      %v639 = vand.u32 %v638, 4294901760
      %v640 = vsub.f32 %v638, %v639
      %v641 = vand.u32 %v640, 4294901760
      %642 = vmatprep.subr.mxu0 %v641
      %v643 = vand.u32 %v533, 4294901760
      %v644 = vsub.f32 %v533, %v643
      %v645 = vand.u32 %v644, 4294901760
      %v646 = vsub.f32 %v644, %v645
      %v647 = vand.u32 %v646, 4294901760
      %648 = vmatpush1.msra.mxu0 %v647
      %v649 = vand.u32 %v536, 4294901760
      %v650 = vsub.f32 %v536, %v649
      %v651 = vand.u32 %v650, 4294901760
      %v652 = vsub.f32 %v650, %v651
      %v653 = vand.u32 %v652, 4294901760
      %654 = vmatprep.subr.mxu0 %v653
      %v655 = vand.u32 %v535, 4294901760
      %v656 = vsub.f32 %v535, %v655
      %v657 = vand.u32 %v656, 4294901760
      %v658 = vsub.f32 %v656, %v657
      %v659 = vand.u32 %v658, 4294901760
      %660 = vmatpush1.msra.mxu0 %v659
      %v661 = vand.u32 %v538, 4294901760
      %v662 = vsub.f32 %v538, %v661
      %v663 = vand.u32 %v662, 4294901760
      %v664 = vsub.f32 %v662, %v663
      %v665 = vand.u32 %v664, 4294901760
      %666 = vmatprep.subr.mxu0 %v665
      %v667 = vand.u32 %v537, 4294901760
      %v668 = vsub.f32 %v537, %v667
      %v669 = vand.u32 %v668, 4294901760
      %v670 = vsub.f32 %v668, %v669
      %v671 = vand.u32 %v670, 4294901760
      %672 = vmatpush1.msra.mxu0 %v671
      %v673 = vand.u32 %v540, 4294901760
      %v674 = vsub.f32 %v540, %v673
      %v675 = vand.u32 %v674, 4294901760
      %v676 = vsub.f32 %v674, %v675
      %v677 = vand.u32 %v676, 4294901760
      %678 = vmatprep.subr.mxu0 %v677
      %v679 = vand.u32 %v539, 4294901760
      %v680 = vsub.f32 %v539, %v679
      %v681 = vand.u32 %v680, 4294901760
      %v682 = vsub.f32 %v680, %v681
      %v683 = vand.u32 %v682, 4294901760
      %684 = vmatpush1.msra.mxu0 %v683
      %v685 = vand.u32 %v549, 4294901760
      %v686 = vsub.f32 %v549, %v685
      %v687 = vand.u32 %v686, 4294901760
      %v688 = vsub.f32 %v686, %v687
      %v689 = vand.u32 %v688, 4294901760
      %690 = vmatprep.subr.mxu0 %v689
      %v691 = vand.u32 %v546, 4294901760
      %v692 = vsub.f32 %v546, %v691
      %v693 = vand.u32 %v692, 4294901760
      %v694 = vsub.f32 %v692, %v693
      %v695 = vand.u32 %v694, 4294901760
      %696 = vmatpush1.msra.mxu0 %v695
      %697 = vmatprep.subr.mxu0 0.0
      %698 = vmatpush1.msra.mxu0 0.0
      %699 = vmatprep.subr.mxu0 0.0
      %700 = vmatpush1.msra.mxu0 0.0
      %701 = vmatprep.subr.mxu0 0.0
      %702 = vmatpush1.msra.mxu0 0.0
      %703 = vmatprep.subr.mxu0 0.0
      %704 = vmatpush1.msra.mxu0 0.0
      %705 = vmatprep.subr.mxu0 0.0
      %706 = vmatpush1.msra.mxu0 0.0
      %707 = vmatprep.subr.mxu0 0.0
      %708 = vmatpush1.msra.mxu0 0.0
      %709 = vmatprep.subr.mxu0 0.0
      %710 = vmatpush1.msra.mxu0 0.0
      %711 = vmatprep.subr.mxu0 0.0
      %712 = vmatpush1.msra.mxu0 0.0
      %713 = vmatprep.subr.mxu0 0.0
      %714 = vmatpush1.msra.mxu0 0.0
      %715 = vmatprep.subr.mxu0 0.0
      %716 = vmatpush1.msra.mxu0 0.0
      %717 = vmatprep.subr.mxu0 0.0
      %718 = vmatpush1.msra.mxu0 0.0
      %719 = vmatprep.subr.mxu0 0.0
      %720 = vmatpush1.msra.mxu0 0.0
      %721 = vmatprep.subr.mxu0 0.0
      %722 = vmatpush1.msra.mxu0 0.0
      %723 = vmatprep.subr.mxu0 0.0
      %724 = vmatpush1.msra.mxu0 0.0
      %725 = vmatprep.subr.mxu0 0.0
      %726 = vmatpush1.msra.mxu0 0.0
      %727 = vmatprep.subr.mxu0 0.0
      %728 = vmatpush1.msra.mxu0 0.0
      %729 = vmatprep.subr.mxu0 0.0
      %730 = vmatpush1.msra.mxu0 0.0
      %731 = vmatprep.subr.mxu0 0.0
      %732 = vmatpush1.msra.mxu0 0.0
      %733 = vmatprep.subr.mxu0 0.0
      %734 = vmatpush1.msra.mxu0 0.0
      %735 = vmatprep.subr.mxu0 0.0
      %736 = vmatpush1.msra.mxu0 0.0
      %737 = vmatprep.subr.mxu0 0.0
      %738 = vmatpush1.msra.mxu0 0.0
      %739 = vmatprep.subr.mxu0 0.0
      %740 = vmatpush1.msra.mxu0 0.0
      %741 = vmatprep.subr.mxu0 0.0
      %742 = vmatpush1.msra.mxu0 0.0
      %743 = vmatprep.subr.mxu0 0.0
      %744 = vmatpush1.msra.mxu0 0.0
      %745 = vmatprep.subr.mxu0 0.0
      %746 = vmatpush1.msra.mxu0 0.0
      %747 = vmatprep.subr.mxu0 0.0
      %748 = vmatpush1.msra.mxu0 0.0
      %749 = vmatprep.subr.mxu0 0.0
      %750 = vmatpush1.msra.mxu0 0.0
      %751 = vmatprep.mubr.f32.mxu0 0.0
      %v752 = vand.u32 %v543, 4294901760
      %753 = vmatmul.mubr.f32.gmra.mrb[0].mxu0 %v752
      %v754 = vpop.f32.mrb[0].mxu0
      %v755 = vadd.f32 %v633, %v754
      %v756 = vpop.f32.mrb[0].mxu0
      %v757 = vadd.f32 %v635, %v756
      %758 = vdwg.mxu0
      %v759 = vand.u32 %v534, 4294901760
      %v760 = vsub.f32 %v534, %v759
      %761 = vmatprep.subr.mxu0 %v760
      %v762 = vand.u32 %v533, 4294901760
      %v763 = vsub.f32 %v533, %v762
      %764 = vmatpush1.msra.mxu0 %v763
      %v765 = vand.u32 %v536, 4294901760
      %v766 = vsub.f32 %v536, %v765
      %767 = vmatprep.subr.mxu0 %v766
      %v768 = vand.u32 %v535, 4294901760
      %v769 = vsub.f32 %v535, %v768
      %770 = vmatpush1.msra.mxu0 %v769
      %v771 = vand.u32 %v538, 4294901760
      %v772 = vsub.f32 %v538, %v771
      %773 = vmatprep.subr.mxu0 %v772
      %v774 = vand.u32 %v537, 4294901760
      %v775 = vsub.f32 %v537, %v774
      %776 = vmatpush1.msra.mxu0 %v775
      %v777 = vand.u32 %v540, 4294901760
      %v778 = vsub.f32 %v540, %v777
      %779 = vmatprep.subr.mxu0 %v778
      %v780 = vand.u32 %v539, 4294901760
      %v781 = vsub.f32 %v539, %v780
      %782 = vmatpush1.msra.mxu0 %v781
      %v783 = vand.u32 %v549, 4294901760
      %v784 = vsub.f32 %v549, %v783
      %785 = vmatprep.subr.mxu0 %v784
      %v786 = vand.u32 %v546, 4294901760
      %v787 = vsub.f32 %v546, %v786
      %788 = vmatpush1.msra.mxu0 %v787
      %789 = vmatprep.subr.mxu0 0.0
      %790 = vmatpush1.msra.mxu0 0.0
      %791 = vmatprep.subr.mxu0 0.0
      %792 = vmatpush1.msra.mxu0 0.0
      %793 = vmatprep.subr.mxu0 0.0
      %794 = vmatpush1.msra.mxu0 0.0
      %795 = vmatprep.subr.mxu0 0.0
      %796 = vmatpush1.msra.mxu0 0.0
      %797 = vmatprep.subr.mxu0 0.0
      %798 = vmatpush1.msra.mxu0 0.0
      %799 = vmatprep.subr.mxu0 0.0
      %800 = vmatpush1.msra.mxu0 0.0
      %801 = vmatprep.subr.mxu0 0.0
      %802 = vmatpush1.msra.mxu0 0.0
      %803 = vmatprep.subr.mxu0 0.0
      %804 = vmatpush1.msra.mxu0 0.0
      %805 = vmatprep.subr.mxu0 0.0
      %806 = vmatpush1.msra.mxu0 0.0
      %807 = vmatprep.subr.mxu0 0.0
      %808 = vmatpush1.msra.mxu0 0.0
      %809 = vmatprep.subr.mxu0 0.0
      %810 = vmatpush1.msra.mxu0 0.0
      %811 = vmatprep.subr.mxu0 0.0
      %812 = vmatpush1.msra.mxu0 0.0
      %813 = vmatprep.subr.mxu0 0.0
      %814 = vmatpush1.msra.mxu0 0.0
      %815 = vmatprep.subr.mxu0 0.0
      %816 = vmatpush1.msra.mxu0 0.0
      %817 = vmatprep.subr.mxu0 0.0
      %818 = vmatpush1.msra.mxu0 0.0
      %819 = vmatprep.subr.mxu0 0.0
      %820 = vmatpush1.msra.mxu0 0.0
      %821 = vmatprep.subr.mxu0 0.0
      %822 = vmatpush1.msra.mxu0 0.0
      %823 = vmatprep.subr.mxu0 0.0
      %824 = vmatpush1.msra.mxu0 0.0
      %825 = vmatprep.subr.mxu0 0.0
      %826 = vmatpush1.msra.mxu0 0.0
      %827 = vmatprep.subr.mxu0 0.0
      %828 = vmatpush1.msra.mxu0 0.0
      %829 = vmatprep.subr.mxu0 0.0
      %830 = vmatpush1.msra.mxu0 0.0
      %831 = vmatprep.subr.mxu0 0.0
      %832 = vmatpush1.msra.mxu0 0.0
      %833 = vmatprep.subr.mxu0 0.0
      %834 = vmatpush1.msra.mxu0 0.0
      %835 = vmatprep.subr.mxu0 0.0
      %836 = vmatpush1.msra.mxu0 0.0
      %837 = vmatprep.subr.mxu0 0.0
      %838 = vmatpush1.msra.mxu0 0.0
      %839 = vmatprep.subr.mxu0 0.0
      %840 = vmatpush1.msra.mxu0 0.0
      %841 = vmatprep.subr.mxu0 0.0
      %842 = vmatpush1.msra.mxu0 0.0
      %843 = vmatprep.mubr.f32.mxu0 0.0
      %v844 = vand.u32 %v543, 4294901760
      %v845 = vsub.f32 %v543, %v844
      %846 = vmatmul.mubr.f32.gmra.mrb[0].mxu0 %v845
      %v847 = vpop.f32.mrb[0].mxu0
      %v848 = vadd.f32 %v755, %v847
      %v849 = vpop.f32.mrb[0].mxu0
      %v850 = vadd.f32 %v757, %v849
      %851 = vdwg.mxu0
      %v852 = vand.u32 %v534, 4294901760
      %853 = vmatprep.subr.mxu0 %v852
      %v854 = vand.u32 %v533, 4294901760
      %855 = vmatpush1.msra.mxu0 %v854
      %v856 = vand.u32 %v536, 4294901760
      %857 = vmatprep.subr.mxu0 %v856
      %v858 = vand.u32 %v535, 4294901760
      %859 = vmatpush1.msra.mxu0 %v858
      %v860 = vand.u32 %v538, 4294901760
      %861 = vmatprep.subr.mxu0 %v860
      %v862 = vand.u32 %v537, 4294901760
      %863 = vmatpush1.msra.mxu0 %v862
      %v864 = vand.u32 %v540, 4294901760
      %865 = vmatprep.subr.mxu0 %v864
      %v866 = vand.u32 %v539, 4294901760
      %867 = vmatpush1.msra.mxu0 %v866
      %v868 = vand.u32 %v549, 4294901760
      %869 = vmatprep.subr.mxu0 %v868
      %v870 = vand.u32 %v546, 4294901760
      %871 = vmatpush1.msra.mxu0 %v870
      %872 = vmatprep.subr.mxu0 0.0
      %873 = vmatpush1.msra.mxu0 0.0
      %874 = vmatprep.subr.mxu0 0.0
      %875 = vmatpush1.msra.mxu0 0.0
      %876 = vmatprep.subr.mxu0 0.0
      %877 = vmatpush1.msra.mxu0 0.0
      %878 = vmatprep.subr.mxu0 0.0
      %879 = vmatpush1.msra.mxu0 0.0
      %880 = vmatprep.subr.mxu0 0.0
      %881 = vmatpush1.msra.mxu0 0.0
      %882 = vmatprep.subr.mxu0 0.0
      %883 = vmatpush1.msra.mxu0 0.0
      %884 = vmatprep.subr.mxu0 0.0
      %885 = vmatpush1.msra.mxu0 0.0
      %886 = vmatprep.subr.mxu0 0.0
      %887 = vmatpush1.msra.mxu0 0.0
      %888 = vmatprep.subr.mxu0 0.0
      %889 = vmatpush1.msra.mxu0 0.0
      %890 = vmatprep.subr.mxu0 0.0
      %891 = vmatpush1.msra.mxu0 0.0
      %892 = vmatprep.subr.mxu0 0.0
      %893 = vmatpush1.msra.mxu0 0.0
      %894 = vmatprep.subr.mxu0 0.0
      %895 = vmatpush1.msra.mxu0 0.0
      %896 = vmatprep.subr.mxu0 0.0
      %897 = vmatpush1.msra.mxu0 0.0
      %898 = vmatprep.subr.mxu0 0.0
      %899 = vmatpush1.msra.mxu0 0.0
      %900 = vmatprep.subr.mxu0 0.0
      %901 = vmatpush1.msra.mxu0 0.0
      %902 = vmatprep.subr.mxu0 0.0
      %903 = vmatpush1.msra.mxu0 0.0
      %904 = vmatprep.subr.mxu0 0.0
      %905 = vmatpush1.msra.mxu0 0.0
      %906 = vmatprep.subr.mxu0 0.0
      %907 = vmatpush1.msra.mxu0 0.0
      %908 = vmatprep.subr.mxu0 0.0
      %909 = vmatpush1.msra.mxu0 0.0
      %910 = vmatprep.subr.mxu0 0.0
      %911 = vmatpush1.msra.mxu0 0.0
      %912 = vmatprep.subr.mxu0 0.0
      %913 = vmatpush1.msra.mxu0 0.0
      %914 = vmatprep.subr.mxu0 0.0
      %915 = vmatpush1.msra.mxu0 0.0
      %916 = vmatprep.subr.mxu0 0.0
      %917 = vmatpush1.msra.mxu0 0.0
      %918 = vmatprep.subr.mxu0 0.0
      %919 = vmatpush1.msra.mxu0 0.0
      %920 = vmatprep.subr.mxu0 0.0
      %921 = vmatpush1.msra.mxu0 0.0
      %922 = vmatprep.subr.mxu0 0.0
      %923 = vmatpush1.msra.mxu0 0.0
      %924 = vmatprep.subr.mxu0 0.0
      %925 = vmatpush1.msra.mxu0 0.0
      %926 = vmatprep.mubr.f32.mxu0 0.0
      %v927 = vand.u32 %v543, 4294901760
      %v928 = vsub.f32 %v543, %v927
      %v929 = vand.u32 %v928, 4294901760
      %930 = vmatmul.mubr.f32.gmra.mrb[0].mxu0 %v929
      %v931 = vpop.f32.mrb[0].mxu0
      %v932 = vadd.f32 %v848, %v931
      %v933 = vpop.f32.mrb[0].mxu0
      %v934 = vadd.f32 %v850, %v933
      %935 = vdwg.mxu0
      %v936 = vand.u32 %v534, 4294901760
      %v937 = vsub.f32 %v534, %v936
      %v938 = vand.u32 %v937, 4294901760
      %939 = vmatprep.subr.mxu0 %v938
      %v940 = vand.u32 %v533, 4294901760
      %v941 = vsub.f32 %v533, %v940
      %v942 = vand.u32 %v941, 4294901760
      %943 = vmatpush1.msra.mxu0 %v942
      %v944 = vand.u32 %v536, 4294901760
      %v945 = vsub.f32 %v536, %v944
      %v946 = vand.u32 %v945, 4294901760
      %947 = vmatprep.subr.mxu0 %v946
      %v948 = vand.u32 %v535, 4294901760
      %v949 = vsub.f32 %v535, %v948
      %v950 = vand.u32 %v949, 4294901760
      %951 = vmatpush1.msra.mxu0 %v950
      %v952 = vand.u32 %v538, 4294901760
      %v953 = vsub.f32 %v538, %v952
      %v954 = vand.u32 %v953, 4294901760
      %955 = vmatprep.subr.mxu0 %v954
      %v956 = vand.u32 %v537, 4294901760
      %v957 = vsub.f32 %v537, %v956
      %v958 = vand.u32 %v957, 4294901760
      %959 = vmatpush1.msra.mxu0 %v958
      %v960 = vand.u32 %v540, 4294901760
      %v961 = vsub.f32 %v540, %v960
      %v962 = vand.u32 %v961, 4294901760
      %963 = vmatprep.subr.mxu0 %v962
      %v964 = vand.u32 %v539, 4294901760
      %v965 = vsub.f32 %v539, %v964
      %v966 = vand.u32 %v965, 4294901760
      %967 = vmatpush1.msra.mxu0 %v966
      %v968 = vand.u32 %v549, 4294901760
      %v969 = vsub.f32 %v549, %v968
      %v970 = vand.u32 %v969, 4294901760
      %971 = vmatprep.subr.mxu0 %v970
      %v972 = vand.u32 %v546, 4294901760
      %v973 = vsub.f32 %v546, %v972
      %v974 = vand.u32 %v973, 4294901760
      %975 = vmatpush1.msra.mxu0 %v974
      %976 = vmatprep.subr.mxu0 0.0
      %977 = vmatpush1.msra.mxu0 0.0
      %978 = vmatprep.subr.mxu0 0.0
      %979 = vmatpush1.msra.mxu0 0.0
      %980 = vmatprep.subr.mxu0 0.0
      %981 = vmatpush1.msra.mxu0 0.0
      %982 = vmatprep.subr.mxu0 0.0
      %983 = vmatpush1.msra.mxu0 0.0
      %984 = vmatprep.subr.mxu0 0.0
      %985 = vmatpush1.msra.mxu0 0.0
      %986 = vmatprep.subr.mxu0 0.0
      %987 = vmatpush1.msra.mxu0 0.0
      %988 = vmatprep.subr.mxu0 0.0
      %989 = vmatpush1.msra.mxu0 0.0
      %990 = vmatprep.subr.mxu0 0.0
      %991 = vmatpush1.msra.mxu0 0.0
      %992 = vmatprep.subr.mxu0 0.0
      %993 = vmatpush1.msra.mxu0 0.0
      %994 = vmatprep.subr.mxu0 0.0
      %995 = vmatpush1.msra.mxu0 0.0
      %996 = vmatprep.subr.mxu0 0.0
      %997 = vmatpush1.msra.mxu0 0.0
      %998 = vmatprep.subr.mxu0 0.0
      %999 = vmatpush1.msra.mxu0 0.0
      %1000 = vmatprep.subr.mxu0 0.0
      %1001 = vmatpush1.msra.mxu0 0.0
      %1002 = vmatprep.subr.mxu0 0.0
      %1003 = vmatpush1.msra.mxu0 0.0
      %1004 = vmatprep.subr.mxu0 0.0
      %1005 = vmatpush1.msra.mxu0 0.0
      %1006 = vmatprep.subr.mxu0 0.0
      %1007 = vmatpush1.msra.mxu0 0.0
      %1008 = vmatprep.subr.mxu0 0.0
      %1009 = vmatpush1.msra.mxu0 0.0
      %1010 = vmatprep.subr.mxu0 0.0
      %1011 = vmatpush1.msra.mxu0 0.0
      %1012 = vmatprep.subr.mxu0 0.0
      %1013 = vmatpush1.msra.mxu0 0.0
      %1014 = vmatprep.subr.mxu0 0.0
      %1015 = vmatpush1.msra.mxu0 0.0
      %1016 = vmatprep.subr.mxu0 0.0
      %1017 = vmatpush1.msra.mxu0 0.0
      %1018 = vmatprep.subr.mxu0 0.0
      %1019 = vmatpush1.msra.mxu0 0.0
      %1020 = vmatprep.subr.mxu0 0.0
      %1021 = vmatpush1.msra.mxu0 0.0
      %1022 = vmatprep.subr.mxu0 0.0
      %1023 = vmatpush1.msra.mxu0 0.0
      %1024 = vmatprep.subr.mxu0 0.0
      %1025 = vmatpush1.msra.mxu0 0.0
      %1026 = vmatprep.subr.mxu0 0.0
      %1027 = vmatpush1.msra.mxu0 0.0
      %1028 = vmatprep.subr.mxu0 0.0
      %1029 = vmatpush1.msra.mxu0 0.0
      %1030 = vmatprep.mubr.f32.mxu0 0.0
      %v1031 = vand.u32 %v543, 4294901760
      %1032 = vmatmul.mubr.f32.gmra.mrb[0].mxu0 %v1031
      %v1033 = vpop.f32.mrb[0].mxu0
      %v1034 = vadd.f32 %v932, %v1033
      %v1035 = vpop.f32.mrb[0].mxu0
      %v1036 = vadd.f32 %v934, %v1035
      %1037 = vdwg.mxu0
      %v1038 = vand.u32 %v534, 4294901760
      %1039 = vmatprep.subr.mxu0 %v1038
      %v1040 = vand.u32 %v533, 4294901760
      %1041 = vmatpush1.msra.mxu0 %v1040
      %v1042 = vand.u32 %v536, 4294901760
      %1043 = vmatprep.subr.mxu0 %v1042
      %v1044 = vand.u32 %v535, 4294901760
      %1045 = vmatpush1.msra.mxu0 %v1044
      %v1046 = vand.u32 %v538, 4294901760
      %1047 = vmatprep.subr.mxu0 %v1046
      %v1048 = vand.u32 %v537, 4294901760
      %1049 = vmatpush1.msra.mxu0 %v1048
      %v1050 = vand.u32 %v540, 4294901760
      %1051 = vmatprep.subr.mxu0 %v1050
      %v1052 = vand.u32 %v539, 4294901760
      %1053 = vmatpush1.msra.mxu0 %v1052
      %v1054 = vand.u32 %v549, 4294901760
      %1055 = vmatprep.subr.mxu0 %v1054
      %v1056 = vand.u32 %v546, 4294901760
      %1057 = vmatpush1.msra.mxu0 %v1056
      %1058 = vmatprep.subr.mxu0 0.0
      %1059 = vmatpush1.msra.mxu0 0.0
      %1060 = vmatprep.subr.mxu0 0.0
      %1061 = vmatpush1.msra.mxu0 0.0
      %1062 = vmatprep.subr.mxu0 0.0
      %1063 = vmatpush1.msra.mxu0 0.0
      %1064 = vmatprep.subr.mxu0 0.0
      %1065 = vmatpush1.msra.mxu0 0.0
      %1066 = vmatprep.subr.mxu0 0.0
      %1067 = vmatpush1.msra.mxu0 0.0
      %1068 = vmatprep.subr.mxu0 0.0
      %1069 = vmatpush1.msra.mxu0 0.0
      %1070 = vmatprep.subr.mxu0 0.0
      %1071 = vmatpush1.msra.mxu0 0.0
      %1072 = vmatprep.subr.mxu0 0.0
      %1073 = vmatpush1.msra.mxu0 0.0
      %1074 = vmatprep.subr.mxu0 0.0
      %1075 = vmatpush1.msra.mxu0 0.0
      %1076 = vmatprep.subr.mxu0 0.0
      %1077 = vmatpush1.msra.mxu0 0.0
      %1078 = vmatprep.subr.mxu0 0.0
      %1079 = vmatpush1.msra.mxu0 0.0
      %1080 = vmatprep.subr.mxu0 0.0
      %1081 = vmatpush1.msra.mxu0 0.0
      %1082 = vmatprep.subr.mxu0 0.0
      %1083 = vmatpush1.msra.mxu0 0.0
      %1084 = vmatprep.subr.mxu0 0.0
      %1085 = vmatpush1.msra.mxu0 0.0
      %1086 = vmatprep.subr.mxu0 0.0
      %1087 = vmatpush1.msra.mxu0 0.0
      %1088 = vmatprep.subr.mxu0 0.0
      %1089 = vmatpush1.msra.mxu0 0.0
      %1090 = vmatprep.subr.mxu0 0.0
      %1091 = vmatpush1.msra.mxu0 0.0
      %1092 = vmatprep.subr.mxu0 0.0
      %1093 = vmatpush1.msra.mxu0 0.0
      %1094 = vmatprep.subr.mxu0 0.0
      %1095 = vmatpush1.msra.mxu0 0.0
      %1096 = vmatprep.subr.mxu0 0.0
      %1097 = vmatpush1.msra.mxu0 0.0
      %1098 = vmatprep.subr.mxu0 0.0
      %1099 = vmatpush1.msra.mxu0 0.0
      %1100 = vmatprep.subr.mxu0 0.0
      %1101 = vmatpush1.msra.mxu0 0.0
      %1102 = vmatprep.subr.mxu0 0.0
      %1103 = vmatpush1.msra.mxu0 0.0
      %1104 = vmatprep.subr.mxu0 0.0
      %1105 = vmatpush1.msra.mxu0 0.0
      %1106 = vmatprep.subr.mxu0 0.0
      %1107 = vmatpush1.msra.mxu0 0.0
      %1108 = vmatprep.subr.mxu0 0.0
      %1109 = vmatpush1.msra.mxu0 0.0
      %1110 = vmatprep.subr.mxu0 0.0
      %1111 = vmatpush1.msra.mxu0 0.0
      %1112 = vmatprep.mubr.f32.mxu0 0.0
      %v1113 = vand.u32 %v543, 4294901760
      %1114 = vmatmul.mubr.f32.gmra.mrb[0].mxu0 %v1113
      %v1115 = vpop.f32.mrb[0].mxu0
      %v1116 = vadd.f32 %v1034, %v1115
      %v1117 = vpop.f32.mrb[0].mxu0
      %v1118 = vadd.f32 %v1036, %v1117
      %1119 = vdwg.mxu0
      %1121 = vset.pattern.permute.xlu0 0
      %1122 = vperm.xlu0 %1121, %v374
      %v1123 = vpop.permute.xlu0 %1122
      %v1125 = vmul.f32 %v1116, %v1123
      %v1126 = vmul.f32 %v1118, %v1123
      %1128 = vset.pattern.permute.xlu0 0
      %1129 = vperm.xlu0 %1128, %v375
      %v1130 = vpop.permute.xlu0 %1129
      %v1132 = vadd.f32 %v1125, %v1130
      %v1133 = vadd.f32 %v1126, %v1130
      %v1134 = vmax.f32 %v1132, 0.0
      %v1135 = vmax.f32 %v1133, 0.0
      %1136 = vst [vmem:[#allocation2] sm:$0xff] %v1134
      %1137 = vst [vmem:[#allocation2 + $0x8] sm:$0xff] %v1135
      %v1138 = vld [vmem:[#allocation2] sm:$0xff]
      %v1139 = vld [vmem:[#allocation2 + $0x8] sm:$0xff]
      %1140 = vrot.lane.b32.xlu0 %v1138, 17
      %v1141 = vpop.permute.xlu0 %1140
      %1142 = vrot.lane.b32.xlu0 %v1139, 17
      %v1143 = vpop.permute.xlu0 %1142
      %v1144 = vsel %vm386, %v1141, %v1143
      %v1145 = vsel %vm386, %v1143, %v1141
      %v1146 = vmul.f32 %v1145, %v392
      %v1147 = vmul.f32 %v1144, %v396
      %1148 = vrot.lane.b32.xlu0 %v1138, 16
      %v1149 = vpop.permute.xlu0 %1148
      %1150 = vrot.lane.b32.xlu0 %v1139, 16
      %v1151 = vpop.permute.xlu0 %1150
      %v1152 = vsel %vm403, %v1149, %v1151
      %v1153 = vsel %vm403, %v1151, %v1149
      %v1154 = vmul.f32 %v1153, %v335
      %v1155 = vmul.f32 %v1152, %v336
      %1156 = vrot.lane.b32.xlu0 %v1138, 15
      %v1157 = vpop.permute.xlu0 %1156
      %1158 = vrot.lane.b32.xlu0 %v1139, 15
      %v1159 = vpop.permute.xlu0 %1158
      %v1160 = vsel %vm412, %v1157, %v1159
      %v1161 = vsel %vm412, %v1159, %v1157
      %v1162 = vmul.f32 %v1161, %v418
      %v1163 = vmul.f32 %v1160, %v422
      %1164 = vrot.lane.b32.xlu0 %v1138, 1
      %v1165 = vpop.permute.xlu0 %1164
      %1166 = vrot.lane.b32.xlu0 %v1139, 1
      %v1167 = vpop.permute.xlu0 %1166
      %v1168 = vsel %vm429, %v1165, %v1167
      %v1169 = vsel %vm429, %v1167, %v1165
      %v1170 = vmul.f32 %v1169, %v436
      %v1171 = vmul.f32 %v1168, %v440
      %1172 = vrot.lane.b32.xlu0 %v1138, 127
      %v1173 = vpop.permute.xlu0 %1172
      %1174 = vrot.lane.b32.xlu0 %v1139, 127
      %v1175 = vpop.permute.xlu0 %1174
      %v1176 = vsel %vm449, %v1173, %v1175
      %v1177 = vsel %vm449, %v1175, %v1173
      %v1178 = vmul.f32 %v1176, %v456
      %v1179 = vmul.f32 %v1177, %v460
      %1180 = vrot.lane.b32.xlu0 %v1138, 113
      %v1181 = vpop.permute.xlu0 %1180
      %1182 = vrot.lane.b32.xlu0 %v1139, 113
      %v1183 = vpop.permute.xlu0 %1182
      %v1184 = vsel %vm469, %v1181, %v1183
      %v1185 = vsel %vm469, %v1183, %v1181
      %v1186 = vmul.f32 %v1184, %v475
      %v1187 = vmul.f32 %v1185, %v479
      %1188 = vrot.lane.b32.xlu0 %v1138, 112
      %v1189 = vpop.permute.xlu0 %1188
      %1190 = vrot.lane.b32.xlu0 %v1139, 112
      %v1191 = vpop.permute.xlu0 %1190
      %v1192 = vsel %vm486, %v1189, %v1191
      %v1193 = vsel %vm486, %v1191, %v1189
      %v1194 = vmul.f32 %v1192, %v364
      %v1195 = vmul.f32 %v1193, %v365
      %1196 = vrot.lane.b32.xlu0 %v1138, 111
      %v1197 = vpop.permute.xlu0 %1196
      %1198 = vrot.lane.b32.xlu0 %v1139, 111
      %v1199 = vpop.permute.xlu0 %1198
      %v1200 = vsel %vm495, %v1197, %v1199
      %v1201 = vsel %vm495, %v1199, %v1197
      %v1202 = vmul.f32 %v1200, %v501
      %v1203 = vmul.f32 %v1201, %v505
      %vm1204 = vcmask 588800
      %v1206 = vsel %vm1204, %v373, 0
      %v1208 = vand.u32 %v1147, 4294901760
      %1209 = vmatprep.subr.mxu0 %v1208
      %v1210 = vand.u32 %v1146, 4294901760
      %1211 = vmatpush1.msra.mxu0 %v1210
      %v1212 = vand.u32 %v1155, 4294901760
      %1213 = vmatprep.subr.mxu0 %v1212
      %v1214 = vand.u32 %v1154, 4294901760
      %1215 = vmatpush1.msra.mxu0 %v1214
      %v1216 = vand.u32 %v1163, 4294901760
      %1217 = vmatprep.subr.mxu0 %v1216
      %v1218 = vand.u32 %v1162, 4294901760
      %1219 = vmatpush1.msra.mxu0 %v1218
      %v1220 = vand.u32 %v1171, 4294901760
      %1221 = vmatprep.subr.mxu0 %v1220
      %v1222 = vand.u32 %v1170, 4294901760
      %1223 = vmatpush1.msra.mxu0 %v1222
      %v1224 = vand.u32 %v1139, 4294901760
      %1225 = vmatprep.subr.mxu0 %v1224
      %v1226 = vand.u32 %v1138, 4294901760
      %1227 = vmatpush1.msra.mxu0 %v1226
      %v1228 = vand.u32 %v1179, 4294901760
      %1229 = vmatprep.subr.mxu0 %v1228
      %v1230 = vand.u32 %v1178, 4294901760
      %1231 = vmatpush1.msra.mxu0 %v1230
      %v1232 = vand.u32 %v1187, 4294901760
      %1233 = vmatprep.subr.mxu0 %v1232
      %v1234 = vand.u32 %v1186, 4294901760
      %1235 = vmatpush1.msra.mxu0 %v1234
      %v1236 = vand.u32 %v1195, 4294901760
      %1237 = vmatprep.subr.mxu0 %v1236
      %v1238 = vand.u32 %v1194, 4294901760
      %1239 = vmatpush1.msra.mxu0 %v1238
      %v1240 = vand.u32 %v1203, 4294901760
      %1241 = vmatprep.subr.mxu0 %v1240
      %v1242 = vand.u32 %v1202, 4294901760
      %1243 = vmatpush1.msra.mxu0 %v1242
      %1244 = vmatprep.subr.mxu0 0.0
      %1245 = vmatpush1.msra.mxu0 0.0
      %1246 = vmatprep.subr.mxu0 0.0
      %1247 = vmatpush1.msra.mxu0 0.0
      %1248 = vmatprep.subr.mxu0 0.0
      %1249 = vmatpush1.msra.mxu0 0.0
      %1250 = vmatprep.subr.mxu0 0.0
      %1251 = vmatpush1.msra.mxu0 0.0
      %1252 = vmatprep.subr.mxu0 0.0
      %1253 = vmatpush1.msra.mxu0 0.0
      %1254 = vmatprep.subr.mxu0 0.0
      %1255 = vmatpush1.msra.mxu0 0.0
      %1256 = vmatprep.subr.mxu0 0.0
      %1257 = vmatpush1.msra.mxu0 0.0
      %1258 = vmatprep.subr.mxu0 0.0
      %1259 = vmatpush1.msra.mxu0 0.0
      %1260 = vmatprep.subr.mxu0 0.0
      %1261 = vmatpush1.msra.mxu0 0.0
      %1262 = vmatprep.subr.mxu0 0.0
      %1263 = vmatpush1.msra.mxu0 0.0
      %1264 = vmatprep.subr.mxu0 0.0
      %1265 = vmatpush1.msra.mxu0 0.0
      %1266 = vmatprep.subr.mxu0 0.0
      %1267 = vmatpush1.msra.mxu0 0.0
      %1268 = vmatprep.subr.mxu0 0.0
      %1269 = vmatpush1.msra.mxu0 0.0
      %1270 = vmatprep.subr.mxu0 0.0
      %1271 = vmatpush1.msra.mxu0 0.0
      %1272 = vmatprep.subr.mxu0 0.0
      %1273 = vmatpush1.msra.mxu0 0.0
      %1274 = vmatprep.subr.mxu0 0.0
      %1275 = vmatpush1.msra.mxu0 0.0
      %1276 = vmatprep.subr.mxu0 0.0
      %1277 = vmatpush1.msra.mxu0 0.0
      %1278 = vmatprep.subr.mxu0 0.0
      %1279 = vmatpush1.msra.mxu0 0.0
      %1280 = vmatprep.subr.mxu0 0.0
      %1281 = vmatpush1.msra.mxu0 0.0
      %1282 = vmatprep.subr.mxu0 0.0
      %1283 = vmatpush1.msra.mxu0 0.0
      %1284 = vmatprep.subr.mxu0 0.0
      %1285 = vmatpush1.msra.mxu0 0.0
      %1286 = vmatprep.subr.mxu0 0.0
      %1287 = vmatpush1.msra.mxu0 0.0
      %1288 = vmatprep.subr.mxu0 0.0
      %1289 = vmatpush1.msra.mxu0 0.0
      %1290 = vmatprep.mubr.f32.mxu0 0.0
      %v1291 = vand.u32 %v1206, 4294901760
      %v1292 = vsub.f32 %v1206, %v1291
      %v1293 = vand.u32 %v1292, 4294901760
      %v1294 = vsub.f32 %v1292, %v1293
      %v1295 = vand.u32 %v1294, 4294901760
      %1296 = vmatmul.mubr.f32.gmra.mrb[0].mxu0 %v1295
      %v1297 = vpop.f32.mrb[0].mxu0
      %v1298 = vadd.f32 0.0, %v1297
      %v1299 = vpop.f32.mrb[0].mxu0
      %v1300 = vadd.f32 0.0, %v1299
      %1301 = vdwg.mxu0
      %v1302 = vand.u32 %v1147, 4294901760
      %v1303 = vsub.f32 %v1147, %v1302
      %v1304 = vand.u32 %v1303, 4294901760
      %v1305 = vsub.f32 %v1303, %v1304
      %v1306 = vand.u32 %v1305, 4294901760
      %1307 = vmatprep.subr.mxu0 %v1306
      %v1308 = vand.u32 %v1146, 4294901760
      %v1309 = vsub.f32 %v1146, %v1308
      %v1310 = vand.u32 %v1309, 4294901760
      %v1311 = vsub.f32 %v1309, %v1310
      %v1312 = vand.u32 %v1311, 4294901760
      %1313 = vmatpush1.msra.mxu0 %v1312
      %v1314 = vand.u32 %v1155, 4294901760
      %v1315 = vsub.f32 %v1155, %v1314
      %v1316 = vand.u32 %v1315, 4294901760
      %v1317 = vsub.f32 %v1315, %v1316
      %v1318 = vand.u32 %v1317, 4294901760
      %1319 = vmatprep.subr.mxu0 %v1318
      %v1320 = vand.u32 %v1154, 4294901760
      %v1321 = vsub.f32 %v1154, %v1320
      %v1322 = vand.u32 %v1321, 4294901760
      %v1323 = vsub.f32 %v1321, %v1322
      %v1324 = vand.u32 %v1323, 4294901760
      %1325 = vmatpush1.msra.mxu0 %v1324
      %v1326 = vand.u32 %v1163, 4294901760
      %v1327 = vsub.f32 %v1163, %v1326
      %v1328 = vand.u32 %v1327, 4294901760
      %v1329 = vsub.f32 %v1327, %v1328
      %v1330 = vand.u32 %v1329, 4294901760
      %1331 = vmatprep.subr.mxu0 %v1330
      %v1332 = vand.u32 %v1162, 4294901760
      %v1333 = vsub.f32 %v1162, %v1332
      %v1334 = vand.u32 %v1333, 4294901760
      %v1335 = vsub.f32 %v1333, %v1334
      %v1336 = vand.u32 %v1335, 4294901760
      %1337 = vmatpush1.msra.mxu0 %v1336
      %v1338 = vand.u32 %v1171, 4294901760
      %v1339 = vsub.f32 %v1171, %v1338
      %v1340 = vand.u32 %v1339, 4294901760
      %v1341 = vsub.f32 %v1339, %v1340
      %v1342 = vand.u32 %v1341, 4294901760
      %1343 = vmatprep.subr.mxu0 %v1342
      %v1344 = vand.u32 %v1170, 4294901760
      %v1345 = vsub.f32 %v1170, %v1344
      %v1346 = vand.u32 %v1345, 4294901760
      %v1347 = vsub.f32 %v1345, %v1346
      %v1348 = vand.u32 %v1347, 4294901760
      %1349 = vmatpush1.msra.mxu0 %v1348
      %v1350 = vand.u32 %v1139, 4294901760
      %v1351 = vsub.f32 %v1139, %v1350
      %v1352 = vand.u32 %v1351, 4294901760
      %v1353 = vsub.f32 %v1351, %v1352
      %v1354 = vand.u32 %v1353, 4294901760
      %1355 = vmatprep.subr.mxu0 %v1354
      %v1356 = vand.u32 %v1138, 4294901760
      %v1357 = vsub.f32 %v1138, %v1356
      %v1358 = vand.u32 %v1357, 4294901760
      %v1359 = vsub.f32 %v1357, %v1358
      %v1360 = vand.u32 %v1359, 4294901760
      %1361 = vmatpush1.msra.mxu0 %v1360
      %v1362 = vand.u32 %v1179, 4294901760
      %v1363 = vsub.f32 %v1179, %v1362
      %v1364 = vand.u32 %v1363, 4294901760
      %v1365 = vsub.f32 %v1363, %v1364
      %v1366 = vand.u32 %v1365, 4294901760
      %1367 = vmatprep.subr.mxu0 %v1366
      %v1368 = vand.u32 %v1178, 4294901760
      %v1369 = vsub.f32 %v1178, %v1368
      %v1370 = vand.u32 %v1369, 4294901760
      %v1371 = vsub.f32 %v1369, %v1370
      %v1372 = vand.u32 %v1371, 4294901760
      %1373 = vmatpush1.msra.mxu0 %v1372
      %v1374 = vand.u32 %v1187, 4294901760
      %v1375 = vsub.f32 %v1187, %v1374
      %v1376 = vand.u32 %v1375, 4294901760
      %v1377 = vsub.f32 %v1375, %v1376
      %v1378 = vand.u32 %v1377, 4294901760
      %1379 = vmatprep.subr.mxu0 %v1378
      %v1380 = vand.u32 %v1186, 4294901760
      %v1381 = vsub.f32 %v1186, %v1380
      %v1382 = vand.u32 %v1381, 4294901760
      %v1383 = vsub.f32 %v1381, %v1382
      %v1384 = vand.u32 %v1383, 4294901760
      %1385 = vmatpush1.msra.mxu0 %v1384
      %v1386 = vand.u32 %v1195, 4294901760
      %v1387 = vsub.f32 %v1195, %v1386
      %v1388 = vand.u32 %v1387, 4294901760
      %v1389 = vsub.f32 %v1387, %v1388
      %v1390 = vand.u32 %v1389, 4294901760
      %1391 = vmatprep.subr.mxu0 %v1390
      %v1392 = vand.u32 %v1194, 4294901760
      %v1393 = vsub.f32 %v1194, %v1392
      %v1394 = vand.u32 %v1393, 4294901760
      %v1395 = vsub.f32 %v1393, %v1394
      %v1396 = vand.u32 %v1395, 4294901760
      %1397 = vmatpush1.msra.mxu0 %v1396
      %v1398 = vand.u32 %v1203, 4294901760
      %v1399 = vsub.f32 %v1203, %v1398
      %v1400 = vand.u32 %v1399, 4294901760
      %v1401 = vsub.f32 %v1399, %v1400
      %v1402 = vand.u32 %v1401, 4294901760
      %1403 = vmatprep.subr.mxu0 %v1402
      %v1404 = vand.u32 %v1202, 4294901760
      %v1405 = vsub.f32 %v1202, %v1404
      %v1406 = vand.u32 %v1405, 4294901760
      %v1407 = vsub.f32 %v1405, %v1406
      %v1408 = vand.u32 %v1407, 4294901760
      %1409 = vmatpush1.msra.mxu0 %v1408
      %1410 = vmatprep.subr.mxu0 0.0
      %1411 = vmatpush1.msra.mxu0 0.0
      %1412 = vmatprep.subr.mxu0 0.0
      %1413 = vmatpush1.msra.mxu0 0.0
      %1414 = vmatprep.subr.mxu0 0.0
      %1415 = vmatpush1.msra.mxu0 0.0
      %1416 = vmatprep.subr.mxu0 0.0
      %1417 = vmatpush1.msra.mxu0 0.0
      %1418 = vmatprep.subr.mxu0 0.0
      %1419 = vmatpush1.msra.mxu0 0.0
      %1420 = vmatprep.subr.mxu0 0.0
      %1421 = vmatpush1.msra.mxu0 0.0
      %1422 = vmatprep.subr.mxu0 0.0
      %1423 = vmatpush1.msra.mxu0 0.0
      %1424 = vmatprep.subr.mxu0 0.0
      %1425 = vmatpush1.msra.mxu0 0.0
      %1426 = vmatprep.subr.mxu0 0.0
      %1427 = vmatpush1.msra.mxu0 0.0
      %1428 = vmatprep.subr.mxu0 0.0
      %1429 = vmatpush1.msra.mxu0 0.0
      %1430 = vmatprep.subr.mxu0 0.0
      %1431 = vmatpush1.msra.mxu0 0.0
      %1432 = vmatprep.subr.mxu0 0.0
      %1433 = vmatpush1.msra.mxu0 0.0
      %1434 = vmatprep.subr.mxu0 0.0
      %1435 = vmatpush1.msra.mxu0 0.0
      %1436 = vmatprep.subr.mxu0 0.0
      %1437 = vmatpush1.msra.mxu0 0.0
      %1438 = vmatprep.subr.mxu0 0.0
      %1439 = vmatpush1.msra.mxu0 0.0
      %1440 = vmatprep.subr.mxu0 0.0
      %1441 = vmatpush1.msra.mxu0 0.0
      %1442 = vmatprep.subr.mxu0 0.0
      %1443 = vmatpush1.msra.mxu0 0.0
      %1444 = vmatprep.subr.mxu0 0.0
      %1445 = vmatpush1.msra.mxu0 0.0
      %1446 = vmatprep.subr.mxu0 0.0
      %1447 = vmatpush1.msra.mxu0 0.0
      %1448 = vmatprep.subr.mxu0 0.0
      %1449 = vmatpush1.msra.mxu0 0.0
      %1450 = vmatprep.subr.mxu0 0.0
      %1451 = vmatpush1.msra.mxu0 0.0
      %1452 = vmatprep.subr.mxu0 0.0
      %1453 = vmatpush1.msra.mxu0 0.0
      %1454 = vmatprep.subr.mxu0 0.0
      %1455 = vmatpush1.msra.mxu0 0.0
      %1456 = vmatprep.mubr.f32.mxu0 0.0
      %v1457 = vand.u32 %v1206, 4294901760
      %1458 = vmatmul.mubr.f32.gmra.mrb[0].mxu0 %v1457
      %v1459 = vpop.f32.mrb[0].mxu0
      %v1460 = vadd.f32 %v1298, %v1459
      %v1461 = vpop.f32.mrb[0].mxu0
      %v1462 = vadd.f32 %v1300, %v1461
      %1463 = vdwg.mxu0
      %v1464 = vand.u32 %v1147, 4294901760
      %v1465 = vsub.f32 %v1147, %v1464
      %1466 = vmatprep.subr.mxu0 %v1465
      %v1467 = vand.u32 %v1146, 4294901760
      %v1468 = vsub.f32 %v1146, %v1467
      %1469 = vmatpush1.msra.mxu0 %v1468
      %v1470 = vand.u32 %v1155, 4294901760
      %v1471 = vsub.f32 %v1155, %v1470
      %1472 = vmatprep.subr.mxu0 %v1471
      %v1473 = vand.u32 %v1154, 4294901760
      %v1474 = vsub.f32 %v1154, %v1473
      %1475 = vmatpush1.msra.mxu0 %v1474
      %v1476 = vand.u32 %v1163, 4294901760
      %v1477 = vsub.f32 %v1163, %v1476
      %1478 = vmatprep.subr.mxu0 %v1477
      %v1479 = vand.u32 %v1162, 4294901760
      %v1480 = vsub.f32 %v1162, %v1479
      %1481 = vmatpush1.msra.mxu0 %v1480
      %v1482 = vand.u32 %v1171, 4294901760
      %v1483 = vsub.f32 %v1171, %v1482
      %1484 = vmatprep.subr.mxu0 %v1483
      %v1485 = vand.u32 %v1170, 4294901760
      %v1486 = vsub.f32 %v1170, %v1485
      %1487 = vmatpush1.msra.mxu0 %v1486
      %v1488 = vand.u32 %v1139, 4294901760
      %v1489 = vsub.f32 %v1139, %v1488
      %1490 = vmatprep.subr.mxu0 %v1489
      %v1491 = vand.u32 %v1138, 4294901760
      %v1492 = vsub.f32 %v1138, %v1491
      %1493 = vmatpush1.msra.mxu0 %v1492
      %v1494 = vand.u32 %v1179, 4294901760
      %v1495 = vsub.f32 %v1179, %v1494
      %1496 = vmatprep.subr.mxu0 %v1495
      %v1497 = vand.u32 %v1178, 4294901760
      %v1498 = vsub.f32 %v1178, %v1497
      %1499 = vmatpush1.msra.mxu0 %v1498
      %v1500 = vand.u32 %v1187, 4294901760
      %v1501 = vsub.f32 %v1187, %v1500
      %1502 = vmatprep.subr.mxu0 %v1501
      %v1503 = vand.u32 %v1186, 4294901760
      %v1504 = vsub.f32 %v1186, %v1503
      %1505 = vmatpush1.msra.mxu0 %v1504
      %v1506 = vand.u32 %v1195, 4294901760
      %v1507 = vsub.f32 %v1195, %v1506
      %1508 = vmatprep.subr.mxu0 %v1507
      %v1509 = vand.u32 %v1194, 4294901760
      %v1510 = vsub.f32 %v1194, %v1509
      %1511 = vmatpush1.msra.mxu0 %v1510
      %v1512 = vand.u32 %v1203, 4294901760
      %v1513 = vsub.f32 %v1203, %v1512
      %1514 = vmatprep.subr.mxu0 %v1513
      %v1515 = vand.u32 %v1202, 4294901760
      %v1516 = vsub.f32 %v1202, %v1515
      %1517 = vmatpush1.msra.mxu0 %v1516
      %1518 = vmatprep.subr.mxu0 0.0
      %1519 = vmatpush1.msra.mxu0 0.0
      %1520 = vmatprep.subr.mxu0 0.0
      %1521 = vmatpush1.msra.mxu0 0.0
      %1522 = vmatprep.subr.mxu0 0.0
      %1523 = vmatpush1.msra.mxu0 0.0
      %1524 = vmatprep.subr.mxu0 0.0
      %1525 = vmatpush1.msra.mxu0 0.0
      %1526 = vmatprep.subr.mxu0 0.0
      %1527 = vmatpush1.msra.mxu0 0.0
      %1528 = vmatprep.subr.mxu0 0.0
      %1529 = vmatpush1.msra.mxu0 0.0
      %1530 = vmatprep.subr.mxu0 0.0
      %1531 = vmatpush1.msra.mxu0 0.0
      %1532 = vmatprep.subr.mxu0 0.0
      %1533 = vmatpush1.msra.mxu0 0.0
      %1534 = vmatprep.subr.mxu0 0.0
      %1535 = vmatpush1.msra.mxu0 0.0
      %1536 = vmatprep.subr.mxu0 0.0
      %1537 = vmatpush1.msra.mxu0 0.0
      %1538 = vmatprep.subr.mxu0 0.0
      %1539 = vmatpush1.msra.mxu0 0.0
      %1540 = vmatprep.subr.mxu0 0.0
      %1541 = vmatpush1.msra.mxu0 0.0
      %1542 = vmatprep.subr.mxu0 0.0
      %1543 = vmatpush1.msra.mxu0 0.0
      %1544 = vmatprep.subr.mxu0 0.0
      %1545 = vmatpush1.msra.mxu0 0.0
      %1546 = vmatprep.subr.mxu0 0.0
      %1547 = vmatpush1.msra.mxu0 0.0
      %1548 = vmatprep.subr.mxu0 0.0
      %1549 = vmatpush1.msra.mxu0 0.0
      %1550 = vmatprep.subr.mxu0 0.0
      %1551 = vmatpush1.msra.mxu0 0.0
      %1552 = vmatprep.subr.mxu0 0.0
      %1553 = vmatpush1.msra.mxu0 0.0
      %1554 = vmatprep.subr.mxu0 0.0
      %1555 = vmatpush1.msra.mxu0 0.0
      %1556 = vmatprep.subr.mxu0 0.0
      %1557 = vmatpush1.msra.mxu0 0.0
      %1558 = vmatprep.subr.mxu0 0.0
      %1559 = vmatpush1.msra.mxu0 0.0
      %1560 = vmatprep.subr.mxu0 0.0
      %1561 = vmatpush1.msra.mxu0 0.0
      %1562 = vmatprep.subr.mxu0 0.0
      %1563 = vmatpush1.msra.mxu0 0.0
      %1564 = vmatprep.mubr.f32.mxu0 0.0
      %v1565 = vand.u32 %v1206, 4294901760
      %v1566 = vsub.f32 %v1206, %v1565
      %1567 = vmatmul.mubr.f32.gmra.mrb[0].mxu0 %v1566
      %v1568 = vpop.f32.mrb[0].mxu0
      %v1569 = vadd.f32 %v1460, %v1568
      %v1570 = vpop.f32.mrb[0].mxu0
      %v1571 = vadd.f32 %v1462, %v1570
      %1572 = vdwg.mxu0
      %v1573 = vand.u32 %v1147, 4294901760
      %1574 = vmatprep.subr.mxu0 %v1573
      %v1575 = vand.u32 %v1146, 4294901760
      %1576 = vmatpush1.msra.mxu0 %v1575
      %v1577 = vand.u32 %v1155, 4294901760
      %1578 = vmatprep.subr.mxu0 %v1577
      %v1579 = vand.u32 %v1154, 4294901760
      %1580 = vmatpush1.msra.mxu0 %v1579
      %v1581 = vand.u32 %v1163, 4294901760
      %1582 = vmatprep.subr.mxu0 %v1581
      %v1583 = vand.u32 %v1162, 4294901760
      %1584 = vmatpush1.msra.mxu0 %v1583
      %v1585 = vand.u32 %v1171, 4294901760
      %1586 = vmatprep.subr.mxu0 %v1585
      %v1587 = vand.u32 %v1170, 4294901760
      %1588 = vmatpush1.msra.mxu0 %v1587
      %v1589 = vand.u32 %v1139, 4294901760
      %1590 = vmatprep.subr.mxu0 %v1589
      %v1591 = vand.u32 %v1138, 4294901760
      %1592 = vmatpush1.msra.mxu0 %v1591
      %v1593 = vand.u32 %v1179, 4294901760
      %1594 = vmatprep.subr.mxu0 %v1593
      %v1595 = vand.u32 %v1178, 4294901760
      %1596 = vmatpush1.msra.mxu0 %v1595
      %v1597 = vand.u32 %v1187, 4294901760
      %1598 = vmatprep.subr.mxu0 %v1597
      %v1599 = vand.u32 %v1186, 4294901760
      %1600 = vmatpush1.msra.mxu0 %v1599
      %v1601 = vand.u32 %v1195, 4294901760
      %1602 = vmatprep.subr.mxu0 %v1601
      %v1603 = vand.u32 %v1194, 4294901760
      %1604 = vmatpush1.msra.mxu0 %v1603
      %v1605 = vand.u32 %v1203, 4294901760
      %1606 = vmatprep.subr.mxu0 %v1605
      %v1607 = vand.u32 %v1202, 4294901760
      %1608 = vmatpush1.msra.mxu0 %v1607
      %1609 = vmatprep.subr.mxu0 0.0
      %1610 = vmatpush1.msra.mxu0 0.0
      %1611 = vmatprep.subr.mxu0 0.0
      %1612 = vmatpush1.msra.mxu0 0.0
      %1613 = vmatprep.subr.mxu0 0.0
      %1614 = vmatpush1.msra.mxu0 0.0
      %1615 = vmatprep.subr.mxu0 0.0
      %1616 = vmatpush1.msra.mxu0 0.0
      %1617 = vmatprep.subr.mxu0 0.0
      %1618 = vmatpush1.msra.mxu0 0.0
      %1619 = vmatprep.subr.mxu0 0.0
      %1620 = vmatpush1.msra.mxu0 0.0
      %1621 = vmatprep.subr.mxu0 0.0
      %1622 = vmatpush1.msra.mxu0 0.0
      %1623 = vmatprep.subr.mxu0 0.0
      %1624 = vmatpush1.msra.mxu0 0.0
      %1625 = vmatprep.subr.mxu0 0.0
      %1626 = vmatpush1.msra.mxu0 0.0
      %1627 = vmatprep.subr.mxu0 0.0
      %1628 = vmatpush1.msra.mxu0 0.0
      %1629 = vmatprep.subr.mxu0 0.0
      %1630 = vmatpush1.msra.mxu0 0.0
      %1631 = vmatprep.subr.mxu0 0.0
      %1632 = vmatpush1.msra.mxu0 0.0
      %1633 = vmatprep.subr.mxu0 0.0
      %1634 = vmatpush1.msra.mxu0 0.0
      %1635 = vmatprep.subr.mxu0 0.0
      %1636 = vmatpush1.msra.mxu0 0.0
      %1637 = vmatprep.subr.mxu0 0.0
      %1638 = vmatpush1.msra.mxu0 0.0
      %1639 = vmatprep.subr.mxu0 0.0
      %1640 = vmatpush1.msra.mxu0 0.0
      %1641 = vmatprep.subr.mxu0 0.0
      %1642 = vmatpush1.msra.mxu0 0.0
      %1643 = vmatprep.subr.mxu0 0.0
      %1644 = vmatpush1.msra.mxu0 0.0
      %1645 = vmatprep.subr.mxu0 0.0
      %1646 = vmatpush1.msra.mxu0 0.0
      %1647 = vmatprep.subr.mxu0 0.0
      %1648 = vmatpush1.msra.mxu0 0.0
      %1649 = vmatprep.subr.mxu0 0.0
      %1650 = vmatpush1.msra.mxu0 0.0
      %1651 = vmatprep.subr.mxu0 0.0
      %1652 = vmatpush1.msra.mxu0 0.0
      %1653 = vmatprep.subr.mxu0 0.0
      %1654 = vmatpush1.msra.mxu0 0.0
      %1655 = vmatprep.mubr.f32.mxu0 0.0
      %v1656 = vand.u32 %v1206, 4294901760
      %v1657 = vsub.f32 %v1206, %v1656
      %v1658 = vand.u32 %v1657, 4294901760
      %1659 = vmatmul.mubr.f32.gmra.mrb[0].mxu0 %v1658
      %v1660 = vpop.f32.mrb[0].mxu0
      %v1661 = vadd.f32 %v1569, %v1660
      %v1662 = vpop.f32.mrb[0].mxu0
      %v1663 = vadd.f32 %v1571, %v1662
      %1664 = vdwg.mxu0
      %v1665 = vand.u32 %v1147, 4294901760
      %v1666 = vsub.f32 %v1147, %v1665
      %v1667 = vand.u32 %v1666, 4294901760
      %1668 = vmatprep.subr.mxu0 %v1667
      %v1669 = vand.u32 %v1146, 4294901760
      %v1670 = vsub.f32 %v1146, %v1669
      %v1671 = vand.u32 %v1670, 4294901760
      %1672 = vmatpush1.msra.mxu0 %v1671
      %v1673 = vand.u32 %v1155, 4294901760
      %v1674 = vsub.f32 %v1155, %v1673
      %v1675 = vand.u32 %v1674, 4294901760
      %1676 = vmatprep.subr.mxu0 %v1675
      %v1677 = vand.u32 %v1154, 4294901760
      %v1678 = vsub.f32 %v1154, %v1677
      %v1679 = vand.u32 %v1678, 4294901760
      %1680 = vmatpush1.msra.mxu0 %v1679
      %v1681 = vand.u32 %v1163, 4294901760
      %v1682 = vsub.f32 %v1163, %v1681
      %v1683 = vand.u32 %v1682, 4294901760
      %1684 = vmatprep.subr.mxu0 %v1683
      %v1685 = vand.u32 %v1162, 4294901760
      %v1686 = vsub.f32 %v1162, %v1685
      %v1687 = vand.u32 %v1686, 4294901760
      %1688 = vmatpush1.msra.mxu0 %v1687
      %v1689 = vand.u32 %v1171, 4294901760
      %v1690 = vsub.f32 %v1171, %v1689
      %v1691 = vand.u32 %v1690, 4294901760
      %1692 = vmatprep.subr.mxu0 %v1691
      %v1693 = vand.u32 %v1170, 4294901760
      %v1694 = vsub.f32 %v1170, %v1693
      %v1695 = vand.u32 %v1694, 4294901760
      %1696 = vmatpush1.msra.mxu0 %v1695
      %v1697 = vand.u32 %v1139, 4294901760
      %v1698 = vsub.f32 %v1139, %v1697
      %v1699 = vand.u32 %v1698, 4294901760
      %1700 = vmatprep.subr.mxu0 %v1699
      %v1701 = vand.u32 %v1138, 4294901760
      %v1702 = vsub.f32 %v1138, %v1701
      %v1703 = vand.u32 %v1702, 4294901760
      %1704 = vmatpush1.msra.mxu0 %v1703
      %v1705 = vand.u32 %v1179, 4294901760
      %v1706 = vsub.f32 %v1179, %v1705
      %v1707 = vand.u32 %v1706, 4294901760
      %1708 = vmatprep.subr.mxu0 %v1707
      %v1709 = vand.u32 %v1178, 4294901760
      %v1710 = vsub.f32 %v1178, %v1709
      %v1711 = vand.u32 %v1710, 4294901760
      %1712 = vmatpush1.msra.mxu0 %v1711
      %v1713 = vand.u32 %v1187, 4294901760
      %v1714 = vsub.f32 %v1187, %v1713
      %v1715 = vand.u32 %v1714, 4294901760
      %1716 = vmatprep.subr.mxu0 %v1715
      %v1717 = vand.u32 %v1186, 4294901760
      %v1718 = vsub.f32 %v1186, %v1717
      %v1719 = vand.u32 %v1718, 4294901760
      %1720 = vmatpush1.msra.mxu0 %v1719
      %v1721 = vand.u32 %v1195, 4294901760
      %v1722 = vsub.f32 %v1195, %v1721
      %v1723 = vand.u32 %v1722, 4294901760
      %1724 = vmatprep.subr.mxu0 %v1723
      %v1725 = vand.u32 %v1194, 4294901760
      %v1726 = vsub.f32 %v1194, %v1725
      %v1727 = vand.u32 %v1726, 4294901760
      %1728 = vmatpush1.msra.mxu0 %v1727
      %v1729 = vand.u32 %v1203, 4294901760
      %v1730 = vsub.f32 %v1203, %v1729
      %v1731 = vand.u32 %v1730, 4294901760
      %1732 = vmatprep.subr.mxu0 %v1731
      %v1733 = vand.u32 %v1202, 4294901760
      %v1734 = vsub.f32 %v1202, %v1733
      %v1735 = vand.u32 %v1734, 4294901760
      %1736 = vmatpush1.msra.mxu0 %v1735
      %1737 = vmatprep.subr.mxu0 0.0
      %1738 = vmatpush1.msra.mxu0 0.0
      %1739 = vmatprep.subr.mxu0 0.0
      %1740 = vmatpush1.msra.mxu0 0.0
      %1741 = vmatprep.subr.mxu0 0.0
      %1742 = vmatpush1.msra.mxu0 0.0
      %1743 = vmatprep.subr.mxu0 0.0
      %1744 = vmatpush1.msra.mxu0 0.0
      %1745 = vmatprep.subr.mxu0 0.0
      %1746 = vmatpush1.msra.mxu0 0.0
      %1747 = vmatprep.subr.mxu0 0.0
      %1748 = vmatpush1.msra.mxu0 0.0
      %1749 = vmatprep.subr.mxu0 0.0
      %1750 = vmatpush1.msra.mxu0 0.0
      %1751 = vmatprep.subr.mxu0 0.0
      %1752 = vmatpush1.msra.mxu0 0.0
      %1753 = vmatprep.subr.mxu0 0.0
      %1754 = vmatpush1.msra.mxu0 0.0
      %1755 = vmatprep.subr.mxu0 0.0
      %1756 = vmatpush1.msra.mxu0 0.0
      %1757 = vmatprep.subr.mxu0 0.0
      %1758 = vmatpush1.msra.mxu0 0.0
      %1759 = vmatprep.subr.mxu0 0.0
      %1760 = vmatpush1.msra.mxu0 0.0
      %1761 = vmatprep.subr.mxu0 0.0
      %1762 = vmatpush1.msra.mxu0 0.0
      %1763 = vmatprep.subr.mxu0 0.0
      %1764 = vmatpush1.msra.mxu0 0.0
      %1765 = vmatprep.subr.mxu0 0.0
      %1766 = vmatpush1.msra.mxu0 0.0
      %1767 = vmatprep.subr.mxu0 0.0
      %1768 = vmatpush1.msra.mxu0 0.0
      %1769 = vmatprep.subr.mxu0 0.0
      %1770 = vmatpush1.msra.mxu0 0.0
      %1771 = vmatprep.subr.mxu0 0.0
      %1772 = vmatpush1.msra.mxu0 0.0
      %1773 = vmatprep.subr.mxu0 0.0
      %1774 = vmatpush1.msra.mxu0 0.0
      %1775 = vmatprep.subr.mxu0 0.0
      %1776 = vmatpush1.msra.mxu0 0.0
      %1777 = vmatprep.subr.mxu0 0.0
      %1778 = vmatpush1.msra.mxu0 0.0
      %1779 = vmatprep.subr.mxu0 0.0
      %1780 = vmatpush1.msra.mxu0 0.0
      %1781 = vmatprep.subr.mxu0 0.0
      %1782 = vmatpush1.msra.mxu0 0.0
      %1783 = vmatprep.mubr.f32.mxu0 0.0
      %v1784 = vand.u32 %v1206, 4294901760
      %1785 = vmatmul.mubr.f32.gmra.mrb[0].mxu0 %v1784
      %v1786 = vpop.f32.mrb[0].mxu0
      %v1787 = vadd.f32 %v1661, %v1786
      %v1788 = vpop.f32.mrb[0].mxu0
      %v1789 = vadd.f32 %v1663, %v1788
      %1790 = vdwg.mxu0
      %v1791 = vand.u32 %v1147, 4294901760
      %1792 = vmatprep.subr.mxu0 %v1791
      %v1793 = vand.u32 %v1146, 4294901760
      %1794 = vmatpush1.msra.mxu0 %v1793
      %v1795 = vand.u32 %v1155, 4294901760
      %1796 = vmatprep.subr.mxu0 %v1795
      %v1797 = vand.u32 %v1154, 4294901760
      %1798 = vmatpush1.msra.mxu0 %v1797
      %v1799 = vand.u32 %v1163, 4294901760
      %1800 = vmatprep.subr.mxu0 %v1799
      %v1801 = vand.u32 %v1162, 4294901760
      %1802 = vmatpush1.msra.mxu0 %v1801
      %v1803 = vand.u32 %v1171, 4294901760
      %1804 = vmatprep.subr.mxu0 %v1803
      %v1805 = vand.u32 %v1170, 4294901760
      %1806 = vmatpush1.msra.mxu0 %v1805
      %v1807 = vand.u32 %v1139, 4294901760
      %1808 = vmatprep.subr.mxu0 %v1807
      %v1809 = vand.u32 %v1138, 4294901760
      %1810 = vmatpush1.msra.mxu0 %v1809
      %v1811 = vand.u32 %v1179, 4294901760
      %1812 = vmatprep.subr.mxu0 %v1811
      %v1813 = vand.u32 %v1178, 4294901760
      %1814 = vmatpush1.msra.mxu0 %v1813
      %v1815 = vand.u32 %v1187, 4294901760
      %1816 = vmatprep.subr.mxu0 %v1815
      %v1817 = vand.u32 %v1186, 4294901760
      %1818 = vmatpush1.msra.mxu0 %v1817
      %v1819 = vand.u32 %v1195, 4294901760
      %1820 = vmatprep.subr.mxu0 %v1819
      %v1821 = vand.u32 %v1194, 4294901760
      %1822 = vmatpush1.msra.mxu0 %v1821
      %v1823 = vand.u32 %v1203, 4294901760
      %1824 = vmatprep.subr.mxu0 %v1823
      %v1825 = vand.u32 %v1202, 4294901760
      %1826 = vmatpush1.msra.mxu0 %v1825
      %1827 = vmatprep.subr.mxu0 0.0
      %1828 = vmatpush1.msra.mxu0 0.0
      %1829 = vmatprep.subr.mxu0 0.0
      %1830 = vmatpush1.msra.mxu0 0.0
      %1831 = vmatprep.subr.mxu0 0.0
      %1832 = vmatpush1.msra.mxu0 0.0
      %1833 = vmatprep.subr.mxu0 0.0
      %1834 = vmatpush1.msra.mxu0 0.0
      %1835 = vmatprep.subr.mxu0 0.0
      %1836 = vmatpush1.msra.mxu0 0.0
      %1837 = vmatprep.subr.mxu0 0.0
      %1838 = vmatpush1.msra.mxu0 0.0
      %1839 = vmatprep.subr.mxu0 0.0
      %1840 = vmatpush1.msra.mxu0 0.0
      %1841 = vmatprep.subr.mxu0 0.0
      %1842 = vmatpush1.msra.mxu0 0.0
      %1843 = vmatprep.subr.mxu0 0.0
      %1844 = vmatpush1.msra.mxu0 0.0
      %1845 = vmatprep.subr.mxu0 0.0
      %1846 = vmatpush1.msra.mxu0 0.0
      %1847 = vmatprep.subr.mxu0 0.0
      %1848 = vmatpush1.msra.mxu0 0.0
      %1849 = vmatprep.subr.mxu0 0.0
      %1850 = vmatpush1.msra.mxu0 0.0
      %1851 = vmatprep.subr.mxu0 0.0
      %1852 = vmatpush1.msra.mxu0 0.0
      %1853 = vmatprep.subr.mxu0 0.0
      %1854 = vmatpush1.msra.mxu0 0.0
      %1855 = vmatprep.subr.mxu0 0.0
      %1856 = vmatpush1.msra.mxu0 0.0
      %1857 = vmatprep.subr.mxu0 0.0
      %1858 = vmatpush1.msra.mxu0 0.0
      %1859 = vmatprep.subr.mxu0 0.0
      %1860 = vmatpush1.msra.mxu0 0.0
      %1861 = vmatprep.subr.mxu0 0.0
      %1862 = vmatpush1.msra.mxu0 0.0
      %1863 = vmatprep.subr.mxu0 0.0
      %1864 = vmatpush1.msra.mxu0 0.0
      %1865 = vmatprep.subr.mxu0 0.0
      %1866 = vmatpush1.msra.mxu0 0.0
      %1867 = vmatprep.subr.mxu0 0.0
      %1868 = vmatpush1.msra.mxu0 0.0
      %1869 = vmatprep.subr.mxu0 0.0
      %1870 = vmatpush1.msra.mxu0 0.0
      %1871 = vmatprep.subr.mxu0 0.0
      %1872 = vmatpush1.msra.mxu0 0.0
      %1873 = vmatprep.mubr.f32.mxu0 0.0
      %v1874 = vand.u32 %v1206, 4294901760
      %1875 = vmatmul.mubr.f32.gmra.mrb[0].mxu0 %v1874
      %v1876 = vpop.f32.mrb[0].mxu0
      %v1877 = vadd.f32 %v1787, %v1876
      %v1878 = vpop.f32.mrb[0].mxu0
      %v1879 = vadd.f32 %v1789, %v1878
      %1880 = vdwg.mxu0
      %1882 = vset.pattern.permute.xlu0 0
      %1883 = vperm.xlu0 %1882, %v376
      %v1884 = vpop.permute.xlu0 %1883
      %v1886 = vmul.f32 %v1877, %v1884
      %v1887 = vmul.f32 %v1879, %v1884
      %1889 = vset.pattern.permute.xlu0 0
      %1890 = vperm.xlu0 %1889, %v377
      %v1891 = vpop.permute.xlu0 %1890
      %v1893 = vadd.f32 %v1886, %v1891
      %v1894 = vadd.f32 %v1887, %v1891
      %v1895 = vmax.f32 %v1893, 0.0
      %v1896 = vmax.f32 %v1894, 0.0
      %1897 = vst [vmem:[%s305] sm:$0xff] %v1895
      %1898 = vst [vmem:[%s305 + $0x8] sm:$0xff] %v1896
      %p1899 = scmp.lt.s32.totalorder %s19, 1
      %s1900 = scalar_select %p1899, %s19, 1
      %s1901 = smul.addr %s1900, 2
      %s1902 = smul.addr %s1901, 8
      %s1903 = scalar_lea.vmem %s8, %s1902
      // Predicated region
      $region53: #{double_conv_pallas.1} parent=51 // pred_check
        %p1904 = pneg %p210
      $region54: #{double_conv_pallas.1} parent=51 // pred_check_branch
        %1906 = sbr.rel (%p1904) target = $region56
      $region55: #{double_conv_pallas.1} parent=51 // pred_region
        _
      $region56: #{double_conv_pallas.1} parent=51 // pred_fallthru
        _
    $region52: #{double_conv_pallas.1} parent=5 // pred_fallthru
      _
    %p1907 = scmp.le.s32.totalorder 2, %s14
    // Predicated region
    $region57: #{double_conv_pallas.1} parent=5 // pred_check
      %p1908 = pneg %p1907
    $region58: #{double_conv_pallas.1} parent=5 // pred_check_branch
      %1910 = sbr.rel (%p1908) target = $region60
    $region59: #{double_conv_pallas.1} parent=5 // pred_region
      %s1911 = ssub.s32 %s14, 2
      // Predicated region
      $region61: #{double_conv_pallas.1} parent=59 // pred_check
        %p1912 = pneg %p216
      $region62: #{double_conv_pallas.1} parent=59 // pred_check_branch
        %1914 = sbr.rel (%p1912) target = $region64
      $region63: #{double_conv_pallas.1} parent=59 // pred_region
        %p1915 = scmp.lt.s32.totalorder %s20, 1
        %s1916 = scalar_select %p1915, %s20, 1
        %s1917 = smul.addr %s1916, 2
        %s1918 = smul.addr %s1917, 8
        %s1919 = scalar_lea.vmem %s8, %s1918
      $region64: #{double_conv_pallas.1} parent=59 // pred_fallthru
        _
    $region60: #{double_conv_pallas.1} parent=5 // pred_fallthru
      _
  $region6: #{double_conv_pallas.1} parent=0 // loop_footer
    %s18 = sadd.s32 1, %s14
  $region7: #{double_conv_pallas.1} parent=0 // loop_footer_branch
    %13 = sbr.rel target = $region3
  $region8: #{double_conv_pallas.1} parent=0 // loop_exit
    _

</llo_original>
